<compile_context>
chip_gen: v5e
topology: v5e:2x2
jax: 0.10.0
libtpu: 0.0.40
codegen_flags: <defaults>
</compile_context>

<pallas_src>
import functools
import math

import jax
import jax.numpy as jnp
from jax.experimental import pallas as pl
from jax.experimental.pallas import tpu as pltpu

LN_EPS = 1e-5

_TARGET_ROWS = 512                       # target Bt*S rows per grid step
_VMEM_WORKSET_TARGET = 40 * 1024 * 1024  # conservative: fits v7x with headroom


# -----------------------------------------------------------------------------
# Fused kernel: for a block of batch elements, run ALL encoder layers (layer
# index = grid axis 1), carrying the activations in a VMEM scratch.
# -----------------------------------------------------------------------------
def _encoder_kernel(nb_heads,
                    h_ref,                      # (Bt, S, D)    f32
                    wqkv_ref,                   # (1, D, 3D)    bf16 (Wq|Wk|Wv)
                    wo_ref,                     # (1, D, D)     bf16
                    w1_ref,                     # (1, D, FF)    bf16
                    w2_ref,                     # (1, FF, D)    bf16
                    vec_ref,                    # (1, 9, D)     f32: bq,bk,bv,bo,b2,g1,be1,g2,be2
                    b1_ref,                     # (1, 1, FF)    f32
                    h_out_ref,                  # (Bt, S, D)    f32
                    score_ref,                  # (Bt, S, S)    f32
                    h_state):                   # VMEM scratch (Bt*S, D) f32
    l = pl.program_id(1)
    n_layers = pl.num_programs(1)
    Bt, S, D = h_ref.shape
    M = Bt * S
    H = nb_heads
    hd = D // H
    scale = 1.0 / math.sqrt(hd)

    # Load this batch block into the persistent activation scratch at layer 0.
    @pl.when(l == 0)
    def _():
        h_state[...] = h_ref[...].reshape(M, D)

    x = h_state[...]                            # (M, D) f32
    x_bf = x.astype(jnp.bfloat16)

    vec = vec_ref[0]                            # (9, D) f32
    bq, bk, bv, bo = vec[0], vec[1], vec[2], vec[3]
    b2 = vec[4]
    g1, be1, g2, be2 = vec[5], vec[6], vec[7], vec[8]

    # ---- multi-head self-attention ------------------------------------------
    # Single fused QKV projection (one N=3D MXU pass, bf16 in / f32 accumulate).
    qkv = jnp.dot(x_bf, wqkv_ref[0], preferred_element_type=jnp.float32)  # (M, 3D)
    q = qkv[:, 0 * D:1 * D] + bq                # D-aligned lane slices
    k = qkv[:, 1 * D:2 * D] + bk
    v = qkv[:, 2 * D:3 * D] + bv

    def split_heads(t):                         # (M, D) f32 -> (Bt*H, S, hd) bf16
        t = t.reshape(Bt, S, H, hd)
        t = jnp.transpose(t, (0, 2, 1, 3))      # (Bt, H, S, hd)
        return t.reshape(Bt * H, S, hd).astype(jnp.bfloat16)

    qh = split_heads(q)
    kh = split_heads(k)
    vh = split_heads(v)

    # Single-batch-dim batched matmuls (heads folded into the batch axis).
    s = jnp.einsum("bqd,bkd->bqk", qh, kh,
                   preferred_element_type=jnp.float32) * scale            # (Bt*H, S, S)
    s = s - jnp.max(s, axis=-1, keepdims=True)                            # stable softmax
    p = jnp.exp(s)
    p = p / jnp.sum(p, axis=-1, keepdims=True)                            # exact probs
    o = jnp.einsum("bqk,bkd->bqd", p.astype(jnp.bfloat16), vh,
                   preferred_element_type=jnp.float32)                    # (Bt*H, S, hd)

    # Re-assemble concatenated head output, then ONE K=D output projection.
    o = jnp.transpose(o.reshape(Bt, H, S, hd), (0, 2, 1, 3)).reshape(M, D)
    mha = jnp.dot(o.astype(jnp.bfloat16), wo_ref[0],
                  preferred_element_type=jnp.float32) + bo                # (M, D)

    def layer_norm(y, g, b):
        mu = jnp.mean(y, axis=-1, keepdims=True)
        yc = y - mu
        var = jnp.mean(yc * yc, axis=-1, keepdims=True)
        return yc * jax.lax.rsqrt(var + LN_EPS) * g + b

    h1 = layer_norm(x + mha, g1, be1)                                     # (M, D) f32

    # ---- feed-forward --------------------------------------------------------
    f1 = jnp.dot(h1.astype(jnp.bfloat16), w1_ref[0],
                 preferred_element_type=jnp.float32) + b1_ref[0, 0]
    f1 = jnp.maximum(f1, 0.0)                                             # relu
    f2 = jnp.dot(f1.astype(jnp.bfloat16), w2_ref[0],
                 preferred_element_type=jnp.float32) + b2

    h2 = layer_norm(h1 + f2, g2, be2)                                     # (M, D) f32

    h_state[...] = h2                                                     # carry to next layer

    # Only the final layer's activations / attention score are written to HBM.
    @pl.when(l == n_layers - 1)
    def _():
        h_out_ref[...] = h2.reshape(Bt, S, D)
        score_ref[...] = jnp.mean(p.reshape(Bt, H, S, S), axis=1)          # head-averaged


_VEC_ORDER = ("bq", "bk", "bv", "bo", "b2", "g1", "be1", "g2", "be2")


def _vmem_bytes_estimate(Bt, S, D, FF, H):
    """Rough per-grid-step VMEM working set (double-buffered blocks + temps)."""
    M = Bt * S
    wts = 2 * 2 * (3 * D * D + D * D + 2 * D * FF)           # bf16 weights, x2 buffers
    vecs = 2 * 4 * (9 * D + FF)                               # packed f32 vectors, x2
    h_io = (2 + 2 + 1) * M * D * 4                            # h in x2, h out x2, scratch
    score = 2 * Bt * S * S * 4                                # score out x2
    temps = 4 * (M * 3 * D + M * FF + 6 * M * D) \
        + 4 * 4 * H * Bt * S * S                              # qkv, f1, h temps, attention
    return wts + vecs + h_io + score + temps


def transformer_encoder_net(h, params, nb_heads, *, batch_block=None):
    """Full forward pass. Returns (h_encoded, score_of_last_layer)."""
    B, S, D = h.shape
    L = len(params)
    FF = params[0]["w1"].shape[-1]
    hd = D // nb_heads
    assert D == nb_heads * hd

    # Batch elements per grid step: target 512-1024 matmul rows per step (amortize
    # ~0.35us/step, back-to-back MXU passes), keep >=2 blocks on the parallel batch
    # axis when possible (v7x: 2 TensorCores), and fit the explicit VMEM budget.
    if batch_block is None:
        bt = max(1, min(B, _TARGET_ROWS // max(S, 1)))
        if B >= 2:
            bt = min(bt, max(1, B // 2))
        while B % bt:
            bt -= 1
        while bt > 1 and _vmem_bytes_estimate(bt, S, D, FF, nb_heads) > _VMEM_WORKSET_TARGET:
            bt -= 1
            while B % bt:
                bt -= 1
        batch_block = bt
    Bt = batch_block
    assert B % Bt == 0

    est = _vmem_bytes_estimate(Bt, S, D, FF, nb_heads)
    vmem_limit = int(min(48 * 1024 * 1024, max(32 * 1024 * 1024, est * 1.25)))

    stack = lambda name: jnp.stack([p[name] for p in params], axis=0)

    # Weights stacked over layers; MXU operands in bf16 (halves weight DMA bytes).
    wqkv = jnp.stack(
        [jnp.concatenate([p["wq"], p["wk"], p["wv"]], axis=1) for p in params],
        axis=0).astype(jnp.bfloat16)                            # (L, D, 3D)
    wo = stack("wo").astype(jnp.bfloat16)                       # (L, D, D)
    w1 = stack("w1").astype(jnp.bfloat16)                       # (L, D, FF)
    w2 = stack("w2").astype(jnp.bfloat16)                       # (L, FF, D)
    vecs = jnp.stack(
        [jnp.concatenate([p[n] for n in _VEC_ORDER], axis=0) for p in params],
        axis=0).astype(jnp.float32)                             # (L, 9, D)
    b1 = stack("b1").reshape(L, 1, FF).astype(jnp.float32)      # (L, 1, FF)

    grid = (B // Bt, L)                                         # (parallel, arbitrary)
    in_specs = [
        pl.BlockSpec((Bt, S, D), lambda bi, l: (bi, 0, 0)),             # h (fetched once per bi)
        pl.BlockSpec((1, D, 3 * D), lambda bi, l: (l, 0, 0)),           # fused Wqkv
        pl.BlockSpec((1, D, D), lambda bi, l: (l, 0, 0)),               # Wo
        pl.BlockSpec((1, D, FF), lambda bi, l: (l, 0, 0)),              # W1
        pl.BlockSpec((1, FF, D), lambda bi, l: (l, 0, 0)),              # W2
        pl.BlockSpec((1, 9, D), lambda bi, l: (l, 0, 0)),               # packed (D,) vectors
        pl.BlockSpec((1, 1, FF), lambda bi, l: (l, 0, 0)),              # b1
    ]
    out_specs = (
        pl.BlockSpec((Bt, S, D), lambda bi, l: (bi, 0, 0)),
        pl.BlockSpec((Bt, S, S), lambda bi, l: (bi, 0, 0)),
    )
    out_shape = (
        jax.ShapeDtypeStruct((B, S, D), jnp.float32),
        jax.ShapeDtypeStruct((B, S, S), jnp.float32),
    )

    kernel = functools.partial(_encoder_kernel, nb_heads)
    return pl.pallas_call(
        kernel,
        grid=grid,
        in_specs=in_specs,
        out_specs=out_specs,
        out_shape=out_shape,
        scratch_shapes=[pltpu.VMEM((Bt * S, D), jnp.float32)],   # activation carry
        compiler_params=pltpu.CompilerParams(
            dimension_semantics=("parallel", "arbitrary"),
            vmem_limit_bytes=vmem_limit),
    )(h, wqkv, wo, w1, w2, vecs, b1)


# -----------------------------------------------------------------------------
# Deterministic synthetic parameter init (shapes follow the module __init__)
# -----------------------------------------------------------------------------
def init_params(key, nb_layers, dim_emb, dim_ff):
    params = []
    for _ in range(nb_layers):
        key, *ks = jax.random.split(key, 13)
        p = {
            # MHA projections stored as (in, out) so the kernel computes x @ W + b
            "wq": 0.1 * jax.random.normal(ks[0], (dim_emb, dim_emb), jnp.float32),
            "bq": 0.1 * jax.random.normal(ks[1], (1, dim_emb), jnp.float32),
            "wk": 0.1 * jax.random.normal(ks[2], (dim_emb, dim_emb), jnp.float32),
            "bk": 0.1 * jax.random.normal(ks[3], (1, dim_emb), jnp.float32),
            "wv": 0.1 * jax.random.normal(ks[4], (dim_emb, dim_emb), jnp.float32),
            "bv": 0.1 * jax.random.normal(ks[5], (1, dim_emb), jnp.float32),
            "wo": 0.1 * jax.random.normal(ks[6], (dim_emb, dim_emb), jnp.float32),
            "bo": 0.1 * jax.random.normal(ks[7], (1, dim_emb), jnp.float32),
            # FFN
            "w1": 0.1 * jax.random.normal(ks[8], (dim_emb, dim_ff), jnp.float32),
            "b1": 0.1 * jax.random.normal(ks[9], (1, dim_ff), jnp.float32),
            "w2": 0.1 * jax.random.normal(ks[10], (dim_ff, dim_emb), jnp.float32),
            "b2": 0.1 * jax.random.normal(ks[11], (1, dim_emb), jnp.float32),
            # LayerNorm affine params (batchnorm=False branch)
            "g1": jnp.ones((1, dim_emb), jnp.float32),
            "be1": jnp.zeros((1, dim_emb), jnp.float32),
            "g2": jnp.ones((1, dim_emb), jnp.float32),
            "be2": jnp.zeros((1, dim_emb), jnp.float32),
        }
        params.append(p)
    return params


# -----------------------------------------------------------------------------
# Pure-JAX f32 reference (same math, no Pallas) for a correctness check
# -----------------------------------------------------------------------------
def reference_forward(h, params, nb_heads):
    def ln(x, g, b):
        mu = jnp.mean(x, -1, keepdims=True)
        var = jnp.mean((x - mu) ** 2, -1, keepdims=True)
        return (x - mu) * jax.lax.rsqrt(var + LN_EPS) * g + b

    B, S, D = h.shape
    hd = D // nb_heads
    score = None
    for p in params:
        q = h @ p["wq"] + p["bq"][0]
        k = h @ p["wk"] + p["bk"][0]
        v = h @ p["wv"] + p["bv"][0]
        q = q.reshape(B, S, nb_heads, hd).transpose(0, 2, 1, 3)
        k = k.reshape(B, S, nb_heads, hd).transpose(0, 2, 1, 3)
        v = v.reshape(B, S, nb_heads, hd).transpose(0, 2, 1, 3)
        s = jnp.einsum("bhqd,bhkd->bhqk", q, k) / math.sqrt(hd)
        a = jax.nn.softmax(s, axis=-1)
        o = jnp.einsum("bhqk,bhkd->bhqd", a, v)
        o = o.transpose(0, 2, 1, 3).reshape(B, S, D)
        mha = o @ p["wo"] + p["bo"][0]
        score = jnp.mean(a, axis=1)
        h1 = ln(h + mha, p["g1"][0], p["be1"][0])
        ff = jax.nn.relu(h1 @ p["w1"] + p["b1"][0]) @ p["w2"] + p["b2"][0]
        h = ln(h1 + ff, p["g2"][0], p["be2"][0])
    return h, score


if __name__ == "__main__":
    # Small shapes consistent with the module: h is (bsz, nb_nodes+1, dim_emb).
    bsz, seq, dim_emb = 4, 8, 128
    nb_heads, dim_ff, nb_layers = 4, 256, 2

    key = jax.random.PRNGKey(0)
    k_h, k_p = jax.random.split(key)
    h_in = jax.random.normal(k_h, (bsz, seq, dim_emb), jnp.float32)
    params = init_params(k_p, nb_layers, dim_emb, dim_ff)

    fwd = jax.jit(functools.partial(transformer_encoder_net, nb_heads=nb_heads))
    h_out, score = fwd(h_in, params)
    h_out = jax.block_until_ready(h_out)
    score = jax.block_until_ready(score)

    assert h_out.shape == (bsz, seq, dim_emb)
    assert score.shape == (bsz, seq, seq)

    # Correctness check against the pure-JAX f32 reference.  The kernel uses bf16
    # MXU operands (f32 accumulation), so the tolerance is relaxed accordingly.
    h_ref, s_ref = reference_forward(h_in, params, nb_heads)
    assert jnp.allclose(h_out, h_ref, atol=1.5e-1, rtol=1e-1), \
        float(jnp.max(jnp.abs(h_out - h_ref)))
    assert jnp.allclose(score, s_ref, atol=3e-2, rtol=1e-1), \
        float(jnp.max(jnp.abs(score - s_ref)))

    print("KERNEL_OK")
</pallas_src>

<mosaic_0001>
module attributes {stable_mosaic.version = 11 : i64} {
  func.func @_encoder_kernel(%arg0: i32, %arg1: i32, %arg2: memref<2x8x128xf32, #tpu.memory_space<vmem>>, %arg3: memref<1x128x384xbf16, #tpu.memory_space<vmem>>, %arg4: memref<1x128x128xbf16, #tpu.memory_space<vmem>>, %arg5: memref<1x128x256xbf16, #tpu.memory_space<vmem>>, %arg6: memref<1x256x128xbf16, #tpu.memory_space<vmem>>, %arg7: memref<1x9x128xf32, #tpu.memory_space<vmem>>, %arg8: memref<1x1x256xf32, #tpu.memory_space<vmem>>, %arg9: memref<2x8x128xf32, #tpu.memory_space<vmem>>, %arg10: memref<2x8x8xf32, #tpu.memory_space<vmem>>, %arg11: memref<16x128xf32, #tpu.memory_space<vmem>>) attributes {dimension_semantics = [#tpu.dimension_semantics<parallel>, #tpu.dimension_semantics<arbitrary>], iteration_bounds = array<i64: 2, 2>, scalar_prefetch = 0 : i64, scratch_operands = 1 : i64, tpu.core_type = #tpu.core_type<tc>, window_params = [{transform_indices = @transform_0, window_bounds = array<i64: 2, 8, 128>}, {transform_indices = @transform_1, window_bounds = array<i64: 1, 128, 384>}, {transform_indices = @transform_2, window_bounds = array<i64: 1, 128, 128>}, {transform_indices = @transform_3, window_bounds = array<i64: 1, 128, 256>}, {transform_indices = @transform_4, window_bounds = array<i64: 1, 256, 128>}, {transform_indices = @transform_5, window_bounds = array<i64: 1, 9, 128>}, {transform_indices = @transform_6, window_bounds = array<i64: 1, 1, 256>}, {transform_indices = @transform_7, window_bounds = array<i64: 2, 8, 128>}, {transform_indices = @transform_8, window_bounds = array<i64: 2, 8, 8>}]} {
    %c0_i32 = arith.constant 0 : i32
    %0 = arith.cmpi eq, %arg1, %c0_i32 : i32
    %1 = arith.extui %0 : i1 to i32
    %c0_i32_0 = arith.constant 0 : i32
    %2 = arith.cmpi ne, %1, %c0_i32_0 : i32
    scf.if %2 {
      %c0_42 = arith.constant 0 : index
      %c0_43 = arith.constant 0 : index
      %c0_44 = arith.constant 0 : index
      %144 = vector.load %arg2[%c0_42, %c0_43, %c0_44] : memref<2x8x128xf32, #tpu.memory_space<vmem>>, vector<2x8x128xf32>
      %145 = vector.shape_cast %144 : vector<2x8x128xf32> to vector<16x128xf32>
      %c0_45 = arith.constant 0 : index
      %c0_46 = arith.constant 0 : index
      %146 = vector.load %arg11[%c0_45, %c0_46] : memref<16x128xf32, #tpu.memory_space<vmem>>, vector<16x128xf32>
      tpu.vector_store %arg11[%c0_45, %c0_46], %145 {strides = array<i32>} : memref<16x128xf32, #tpu.memory_space<vmem>>, vector<16x128xf32>,
    } else {
    }
    %c0 = arith.constant 0 : index
    %c0_1 = arith.constant 0 : index
    %3 = vector.load %arg11[%c0, %c0_1] : memref<16x128xf32, #tpu.memory_space<vmem>>, vector<16x128xf32>
    %4 = arith.truncf %3 : vector<16x128xf32> to vector<16x128xbf16>
    %c0_2 = arith.constant 0 : index
    %c0_3 = arith.constant 0 : index
    %c0_4 = arith.constant 0 : index
    %5 = vector.load %arg7[%c0_2, %c0_3, %c0_4] : memref<1x9x128xf32, #tpu.memory_space<vmem>>, vector<1x9x128xf32>
    %6 = vector.shape_cast %5 : vector<1x9x128xf32> to vector<9x128xf32>
    %7 = vector.extract_strided_slice %6 {offsets = [0, 0], sizes = [1, 128], strides = [1, 1]} : vector<9x128xf32> to vector<1x128xf32>
    %8 = vector.shape_cast %7 : vector<1x128xf32> to vector<128xf32>
    %9 = vector.extract_strided_slice %6 {offsets = [1, 0], sizes = [1, 128], strides = [1, 1]} : vector<9x128xf32> to vector<1x128xf32>
    %10 = vector.shape_cast %9 : vector<1x128xf32> to vector<128xf32>
    %11 = vector.extract_strided_slice %6 {offsets = [2, 0], sizes = [1, 128], strides = [1, 1]} : vector<9x128xf32> to vector<1x128xf32>
    %12 = vector.shape_cast %11 : vector<1x128xf32> to vector<128xf32>
    %13 = vector.extract_strided_slice %6 {offsets = [3, 0], sizes = [1, 128], strides = [1, 1]} : vector<9x128xf32> to vector<1x128xf32>
    %14 = vector.shape_cast %13 : vector<1x128xf32> to vector<128xf32>
    %15 = vector.extract_strided_slice %6 {offsets = [4, 0], sizes = [1, 128], strides = [1, 1]} : vector<9x128xf32> to vector<1x128xf32>
    %16 = vector.shape_cast %15 : vector<1x128xf32> to vector<128xf32>
    %17 = vector.extract_strided_slice %6 {offsets = [5, 0], sizes = [1, 128], strides = [1, 1]} : vector<9x128xf32> to vector<1x128xf32>
    %18 = vector.shape_cast %17 : vector<1x128xf32> to vector<128xf32>
    %19 = vector.extract_strided_slice %6 {offsets = [6, 0], sizes = [1, 128], strides = [1, 1]} : vector<9x128xf32> to vector<1x128xf32>
    %20 = vector.shape_cast %19 : vector<1x128xf32> to vector<128xf32>
    %21 = vector.extract_strided_slice %6 {offsets = [7, 0], sizes = [1, 128], strides = [1, 1]} : vector<9x128xf32> to vector<1x128xf32>
    %22 = vector.shape_cast %21 : vector<1x128xf32> to vector<128xf32>
    %23 = vector.extract_strided_slice %6 {offsets = [8, 0], sizes = [1, 128], strides = [1, 1]} : vector<9x128xf32> to vector<1x128xf32>
    %24 = vector.shape_cast %23 : vector<1x128xf32> to vector<128xf32>
    %c0_5 = arith.constant 0 : index
    %c0_6 = arith.constant 0 : index
    %c0_7 = arith.constant 0 : index
    %25 = vector.load %arg3[%c0_5, %c0_6, %c0_7] : memref<1x128x384xbf16, #tpu.memory_space<vmem>>, vector<1x128x384xbf16>
    %26 = vector.shape_cast %25 : vector<1x128x384xbf16> to vector<128x384xbf16>
    %cst = arith.constant dense<0.000000e+00> : vector<16x384xf32>
    %27 = tpu.matmul %4, %26, %cst {dimension_numbers = #tpu.dot_dimension_numbers<[1], [0], [0], [1], [0, 0, 1, 1], [], []>} : vector<16x128xbf16>, vector<128x384xbf16>, vector<16x384xf32> -> vector<16x384xf32>
    %28 = vector.extract_strided_slice %27 {offsets = [0, 0], sizes = [16, 128], strides = [1, 1]} : vector<16x384xf32> to vector<16x128xf32>
    %29 = vector.shape_cast %8 : vector<128xf32> to vector<1x128xf32>
    %30 = vector.broadcast %29 : vector<1x128xf32> to vector<16x128xf32>
    %31 = arith.addf %28, %30 : vector<16x128xf32>
    %32 = vector.extract_strided_slice %27 {offsets = [0, 128], sizes = [16, 128], strides = [1, 1]} : vector<16x384xf32> to vector<16x128xf32>
    %33 = vector.shape_cast %10 : vector<128xf32> to vector<1x128xf32>
    %34 = vector.broadcast %33 : vector<1x128xf32> to vector<16x128xf32>
    %35 = arith.addf %32, %34 : vector<16x128xf32>
    %36 = vector.extract_strided_slice %27 {offsets = [0, 256], sizes = [16, 128], strides = [1, 1]} : vector<16x384xf32> to vector<16x128xf32>
    %37 = vector.shape_cast %12 : vector<128xf32> to vector<1x128xf32>
    %38 = vector.broadcast %37 : vector<1x128xf32> to vector<16x128xf32>
    %39 = arith.addf %36, %38 : vector<16x128xf32>
    %40 = vector.shape_cast %31 : vector<16x128xf32> to vector<2x8x4x32xf32>
    %41 = tpu.transpose %40, [0, 2, 1, 3] : vector<2x8x4x32xf32> -> vector<2x4x8x32xf32>
    %42 = vector.shape_cast %41 : vector<2x4x8x32xf32> to vector<8x8x32xf32>
    %43 = arith.truncf %42 : vector<8x8x32xf32> to vector<8x8x32xbf16>
    %44 = vector.shape_cast %35 : vector<16x128xf32> to vector<2x8x4x32xf32>
    %45 = tpu.transpose %44, [0, 2, 1, 3] : vector<2x8x4x32xf32> -> vector<2x4x8x32xf32>
    %46 = vector.shape_cast %45 : vector<2x4x8x32xf32> to vector<8x8x32xf32>
    %47 = arith.truncf %46 : vector<8x8x32xf32> to vector<8x8x32xbf16>
    %48 = vector.shape_cast %39 : vector<16x128xf32> to vector<2x8x4x32xf32>
    %49 = tpu.transpose %48, [0, 2, 1, 3] : vector<2x8x4x32xf32> -> vector<2x4x8x32xf32>
    %50 = vector.shape_cast %49 : vector<2x4x8x32xf32> to vector<8x8x32xf32>
    %51 = arith.truncf %50 : vector<8x8x32xf32> to vector<8x8x32xbf16>
    "tpu.trace_start"() <{level = 10 : i32, message = "bqd,bkd->bqk"}> : () -> ()
    %cst_8 = arith.constant dense<0.000000e+00> : vector<8x8x8xf32>
    %52 = tpu.matmul %43, %47, %cst_8 {dimension_numbers = #tpu.dot_dimension_numbers<[2], [2], [1], [1], [0, 0, 0, 1, 1, 1], [0], [0]>} : vector<8x8x32xbf16>, vector<8x8x32xbf16>, vector<8x8x8xf32> -> vector<8x8x8xf32>
    "tpu.trace_stop"() : () -> ()
    %cst_9 = arith.constant 0.176776692 : f32
    %53 = vector.broadcast %cst_9 : f32 to vector<8x8x8xf32>
    %54 = arith.mulf %52, %53 : vector<8x8x8xf32>
    %cst_10 = arith.constant dense<0xFF800000> : vector<8x8xf32>
    %55 = vector.multi_reduction <maximumf>, %54, %cst_10 [2] : vector<8x8x8xf32> to vector<8x8xf32>
    %56 = vector.shape_cast %55 : vector<8x8xf32> to vector<8x8x1xf32>
    %57 = vector.broadcast %56 : vector<8x8x1xf32> to vector<8x8x8xf32>
    %58 = arith.subf %54, %57 : vector<8x8x8xf32>
    %59 = math.exp %58 : vector<8x8x8xf32>
    %cst_11 = arith.constant dense<0.000000e+00> : vector<8x8xf32>
    %60 = vector.multi_reduction <add>, %59, %cst_11 [2] : vector<8x8x8xf32> to vector<8x8xf32>
    %61 = vector.shape_cast %60 : vector<8x8xf32> to vector<8x8x1xf32>
    %62 = vector.broadcast %61 : vector<8x8x1xf32> to vector<8x8x8xf32>
    %63 = arith.divf %59, %62 : vector<8x8x8xf32>
    %64 = arith.truncf %63 : vector<8x8x8xf32> to vector<8x8x8xbf16>
    "tpu.trace_start"() <{level = 10 : i32, message = "bqk,bkd->bqd"}> : () -> ()
    %cst_12 = arith.constant dense<0.000000e+00> : vector<8x8x32xf32>
    %65 = tpu.matmul %64, %51, %cst_12 {dimension_numbers = #tpu.dot_dimension_numbers<[2], [1], [1], [2], [0, 0, 0, 1, 1, 2], [0], [0]>} : vector<8x8x8xbf16>, vector<8x8x32xbf16>, vector<8x8x32xf32> -> vector<8x8x32xf32>
    "tpu.trace_stop"() : () -> ()
    %66 = vector.shape_cast %65 : vector<8x8x32xf32> to vector<2x4x8x32xf32>
    %67 = tpu.transpose %66, [0, 2, 1, 3] : vector<2x4x8x32xf32> -> vector<2x8x4x32xf32>
    %68 = vector.shape_cast %67 : vector<2x8x4x32xf32> to vector<16x128xf32>
    %69 = arith.truncf %68 : vector<16x128xf32> to vector<16x128xbf16>
    %c0_13 = arith.constant 0 : index
    %c0_14 = arith.constant 0 : index
    %c0_15 = arith.constant 0 : index
    %70 = vector.load %arg4[%c0_13, %c0_14, %c0_15] : memref<1x128x128xbf16, #tpu.memory_space<vmem>>, vector<1x128x128xbf16>
    %71 = vector.shape_cast %70 : vector<1x128x128xbf16> to vector<128x128xbf16>
    %cst_16 = arith.constant dense<0.000000e+00> : vector<16x128xf32>
    %72 = tpu.matmul %69, %71, %cst_16 {dimension_numbers = #tpu.dot_dimension_numbers<[1], [0], [0], [1], [0, 0, 1, 1], [], []>} : vector<16x128xbf16>, vector<128x128xbf16>, vector<16x128xf32> -> vector<16x128xf32>
    %73 = vector.shape_cast %14 : vector<128xf32> to vector<1x128xf32>
    %74 = vector.broadcast %73 : vector<1x128xf32> to vector<16x128xf32>
    %75 = arith.addf %72, %74 : vector<16x128xf32>
    %76 = arith.addf %3, %75 : vector<16x128xf32>
    %cst_17 = arith.constant dense<0.000000e+00> : vector<16xf32>
    %77 = vector.multi_reduction <add>, %76, %cst_17 [1] : vector<16x128xf32> to vector<16xf32>
    %78 = vector.shape_cast %77 : vector<16xf32> to vector<16x1xf32>
    %cst_18 = arith.constant 1.280000e+02 : f32
    %79 = vector.broadcast %cst_18 : f32 to vector<16x1xf32>
    %80 = arith.divf %78, %79 : vector<16x1xf32>
    %81 = vector.broadcast %80 : vector<16x1xf32> to vector<16x128xf32>
    %82 = arith.subf %76, %81 : vector<16x128xf32>
    %83 = arith.mulf %82, %82 : vector<16x128xf32>
    %cst_19 = arith.constant dense<0.000000e+00> : vector<16xf32>
    %84 = vector.multi_reduction <add>, %83, %cst_19 [1] : vector<16x128xf32> to vector<16xf32>
    %85 = vector.shape_cast %84 : vector<16xf32> to vector<16x1xf32>
    %cst_20 = arith.constant 1.280000e+02 : f32
    %86 = vector.broadcast %cst_20 : f32 to vector<16x1xf32>
    %87 = arith.divf %85, %86 : vector<16x1xf32>
    %cst_21 = arith.constant 9.99999974E-6 : f32
    %88 = vector.broadcast %cst_21 : f32 to vector<16x1xf32>
    %89 = arith.addf %87, %88 : vector<16x1xf32>
    %90 = math.rsqrt %89 : vector<16x1xf32>
    %91 = vector.broadcast %90 : vector<16x1xf32> to vector<16x128xf32>
    %92 = arith.mulf %82, %91 : vector<16x128xf32>
    %93 = vector.shape_cast %18 : vector<128xf32> to vector<1x128xf32>
    %94 = vector.broadcast %93 : vector<1x128xf32> to vector<16x128xf32>
    %95 = arith.mulf %92, %94 : vector<16x128xf32>
    %96 = vector.shape_cast %20 : vector<128xf32> to vector<1x128xf32>
    %97 = vector.broadcast %96 : vector<1x128xf32> to vector<16x128xf32>
    %98 = arith.addf %95, %97 : vector<16x128xf32>
    %99 = arith.truncf %98 : vector<16x128xf32> to vector<16x128xbf16>
    %c0_22 = arith.constant 0 : index
    %c0_23 = arith.constant 0 : index
    %c0_24 = arith.constant 0 : index
    %100 = vector.load %arg5[%c0_22, %c0_23, %c0_24] : memref<1x128x256xbf16, #tpu.memory_space<vmem>>, vector<1x128x256xbf16>
    %101 = vector.shape_cast %100 : vector<1x128x256xbf16> to vector<128x256xbf16>
    %cst_25 = arith.constant dense<0.000000e+00> : vector<16x256xf32>
    %102 = tpu.matmul %99, %101, %cst_25 {dimension_numbers = #tpu.dot_dimension_numbers<[1], [0], [0], [1], [0, 0, 1, 1], [], []>} : vector<16x128xbf16>, vector<128x256xbf16>, vector<16x256xf32> -> vector<16x256xf32>
    %c0_26 = arith.constant 0 : index
    %c0_27 = arith.constant 0 : index
    %c0_28 = arith.constant 0 : index
    %103 = vector.load %arg8[%c0_26, %c0_27, %c0_28] : memref<1x1x256xf32, #tpu.memory_space<vmem>>, vector<1x1x256xf32>
    %104 = vector.shape_cast %103 : vector<1x1x256xf32> to vector<256xf32>
    %105 = vector.shape_cast %104 : vector<256xf32> to vector<1x256xf32>
    %106 = vector.broadcast %105 : vector<1x256xf32> to vector<16x256xf32>
    %107 = arith.addf %102, %106 : vector<16x256xf32>
    %cst_29 = arith.constant 0.000000e+00 : f32
    %108 = vector.broadcast %cst_29 : f32 to vector<16x256xf32>
    %109 = arith.maximumf %107, %108 : vector<16x256xf32>
    %110 = arith.truncf %109 : vector<16x256xf32> to vector<16x256xbf16>
    %c0_30 = arith.constant 0 : index
    %c0_31 = arith.constant 0 : index
    %c0_32 = arith.constant 0 : index
    %111 = vector.load %arg6[%c0_30, %c0_31, %c0_32] : memref<1x256x128xbf16, #tpu.memory_space<vmem>>, vector<1x256x128xbf16>
    %112 = vector.shape_cast %111 : vector<1x256x128xbf16> to vector<256x128xbf16>
    %cst_33 = arith.constant dense<0.000000e+00> : vector<16x128xf32>
    %113 = tpu.matmul %110, %112, %cst_33 {dimension_numbers = #tpu.dot_dimension_numbers<[1], [0], [0], [1], [0, 0, 1, 1], [], []>} : vector<16x256xbf16>, vector<256x128xbf16>, vector<16x128xf32> -> vector<16x128xf32>
    %114 = vector.shape_cast %16 : vector<128xf32> to vector<1x128xf32>
    %115 = vector.broadcast %114 : vector<1x128xf32> to vector<16x128xf32>
    %116 = arith.addf %113, %115 : vector<16x128xf32>
    %117 = arith.addf %98, %116 : vector<16x128xf32>
    %cst_34 = arith.constant dense<0.000000e+00> : vector<16xf32>
    %118 = vector.multi_reduction <add>, %117, %cst_34 [1] : vector<16x128xf32> to vector<16xf32>
    %119 = vector.shape_cast %118 : vector<16xf32> to vector<16x1xf32>
    %cst_35 = arith.constant 1.280000e+02 : f32
    %120 = vector.broadcast %cst_35 : f32 to vector<16x1xf32>
    %121 = arith.divf %119, %120 : vector<16x1xf32>
    %122 = vector.broadcast %121 : vector<16x1xf32> to vector<16x128xf32>
    %123 = arith.subf %117, %122 : vector<16x128xf32>
    %124 = arith.mulf %123, %123 : vector<16x128xf32>
    %cst_36 = arith.constant dense<0.000000e+00> : vector<16xf32>
    %125 = vector.multi_reduction <add>, %124, %cst_36 [1] : vector<16x128xf32> to vector<16xf32>
    %126 = vector.shape_cast %125 : vector<16xf32> to vector<16x1xf32>
    %cst_37 = arith.constant 1.280000e+02 : f32
    %127 = vector.broadcast %cst_37 : f32 to vector<16x1xf32>
    %128 = arith.divf %126, %127 : vector<16x1xf32>
    %cst_38 = arith.constant 9.99999974E-6 : f32
    %129 = vector.broadcast %cst_38 : f32 to vector<16x1xf32>
    %130 = arith.addf %128, %129 : vector<16x1xf32>
    %131 = math.rsqrt %130 : vector<16x1xf32>
    %132 = vector.broadcast %131 : vector<16x1xf32> to vector<16x128xf32>
    %133 = arith.mulf %123, %132 : vector<16x128xf32>
    %134 = vector.shape_cast %22 : vector<128xf32> to vector<1x128xf32>
    %135 = vector.broadcast %134 : vector<1x128xf32> to vector<16x128xf32>
    %136 = arith.mulf %133, %135 : vector<16x128xf32>
    %137 = vector.shape_cast %24 : vector<128xf32> to vector<1x128xf32>
    %138 = vector.broadcast %137 : vector<1x128xf32> to vector<16x128xf32>
    %139 = arith.addf %136, %138 : vector<16x128xf32>
    %c0_39 = arith.constant 0 : index
    %c0_40 = arith.constant 0 : index
    %140 = vector.load %arg11[%c0_39, %c0_40] : memref<16x128xf32, #tpu.memory_space<vmem>>, vector<16x128xf32>
    tpu.vector_store %arg11[%c0_39, %c0_40], %139 {strides = array<i32>} : memref<16x128xf32, #tpu.memory_space<vmem>>, vector<16x128xf32>,
    %c1_i32 = arith.constant 1 : i32
    %141 = arith.cmpi eq, %arg1, %c1_i32 : i32
    %142 = arith.extui %141 : i1 to i32
    %c0_i32_41 = arith.constant 0 : i32
    %143 = arith.cmpi ne, %142, %c0_i32_41 : i32
    scf.if %143 {
      %144 = vector.shape_cast %139 : vector<16x128xf32> to vector<2x8x128xf32>
      %c0_42 = arith.constant 0 : index
      %c0_43 = arith.constant 0 : index
      %c0_44 = arith.constant 0 : index
      %145 = vector.load %arg9[%c0_42, %c0_43, %c0_44] : memref<2x8x128xf32, #tpu.memory_space<vmem>>, vector<2x8x128xf32>
      tpu.vector_store %arg9[%c0_42, %c0_43, %c0_44], %144 {strides = array<i32>} : memref<2x8x128xf32, #tpu.memory_space<vmem>>, vector<2x8x128xf32>,
      %146 = vector.shape_cast %63 : vector<8x8x8xf32> to vector<2x4x8x8xf32>
      %cst_45 = arith.constant dense<0.000000e+00> : vector<2x8x8xf32>
      %147 = vector.multi_reduction <add>, %146, %cst_45 [1] : vector<2x4x8x8xf32> to vector<2x8x8xf32>
      %cst_46 = arith.constant 4.000000e+00 : f32
      %148 = vector.broadcast %cst_46 : f32 to vector<2x8x8xf32>
      %149 = arith.divf %147, %148 : vector<2x8x8xf32>
      %c0_47 = arith.constant 0 : index
      %c0_48 = arith.constant 0 : index
      %c0_49 = arith.constant 0 : index
      %150 = vector.load %arg10[%c0_47, %c0_48, %c0_49] : memref<2x8x8xf32, #tpu.memory_space<vmem>>, vector<2x8x8xf32>
      tpu.vector_store %arg10[%c0_47, %c0_48, %c0_49], %149 {strides = array<i32>} : memref<2x8x8xf32, #tpu.memory_space<vmem>>, vector<2x8x8xf32>,
    } else {
    }
    return
  }
  func.func @transform_0(%arg0: i32, %arg1: i32) -> (i32, i32, i32) {
    %c0_i32 = arith.constant 0 : i32
    %c0_i32_0 = arith.constant 0 : i32
    %c0_i32_1 = arith.constant 0 : i32
    return %arg0, %c0_i32, %c0_i32_0 : i32, i32, i32
  }
  func.func @transform_1(%arg0: i32, %arg1: i32) -> (i32, i32, i32) {
    %c0_i32 = arith.constant 0 : i32
    %c0_i32_0 = arith.constant 0 : i32
    %c0_i32_1 = arith.constant 0 : i32
    return %arg1, %c0_i32, %c0_i32_0 : i32, i32, i32
  }
  func.func @transform_2(%arg0: i32, %arg1: i32) -> (i32, i32, i32) {
    %c0_i32 = arith.constant 0 : i32
    %c0_i32_0 = arith.constant 0 : i32
    %c0_i32_1 = arith.constant 0 : i32
    return %arg1, %c0_i32, %c0_i32_0 : i32, i32, i32
  }
  func.func @transform_3(%arg0: i32, %arg1: i32) -> (i32, i32, i32) {
    %c0_i32 = arith.constant 0 : i32
    %c0_i32_0 = arith.constant 0 : i32
    %c0_i32_1 = arith.constant 0 : i32
    return %arg1, %c0_i32, %c0_i32_0 : i32, i32, i32
  }
  func.func @transform_4(%arg0: i32, %arg1: i32) -> (i32, i32, i32) {
    %c0_i32 = arith.constant 0 : i32
    %c0_i32_0 = arith.constant 0 : i32
    %c0_i32_1 = arith.constant 0 : i32
    return %arg1, %c0_i32, %c0_i32_0 : i32, i32, i32
  }
  func.func @transform_5(%arg0: i32, %arg1: i32) -> (i32, i32, i32) {
    %c0_i32 = arith.constant 0 : i32
    %c0_i32_0 = arith.constant 0 : i32
    %c0_i32_1 = arith.constant 0 : i32
    return %arg1, %c0_i32, %c0_i32_0 : i32, i32, i32
  }
  func.func @transform_6(%arg0: i32, %arg1: i32) -> (i32, i32, i32) {
    %c0_i32 = arith.constant 0 : i32
    %c0_i32_0 = arith.constant 0 : i32
    %c0_i32_1 = arith.constant 0 : i32
    return %arg1, %c0_i32, %c0_i32_0 : i32, i32, i32
  }
  func.func @transform_7(%arg0: i32, %arg1: i32) -> (i32, i32, i32) {
    %c0_i32 = arith.constant 0 : i32
    %c0_i32_0 = arith.constant 0 : i32
    %c0_i32_1 = arith.constant 0 : i32
    return %arg0, %c0_i32, %c0_i32_0 : i32, i32, i32
  }
  func.func @transform_8(%arg0: i32, %arg1: i32) -> (i32, i32, i32) {
    %c0_i32 = arith.constant 0 : i32
    %c0_i32_0 = arith.constant 0 : i32
    %c0_i32_1 = arith.constant 0 : i32
    return %arg0, %c0_i32, %c0_i32_0 : i32, i32, i32
  }
}

</mosaic_0001>

<llo_original>
// kernel: transformer_encoder_net.1
$region0: #{transformer_encoder_net.1}
  #allocation0 [shape = 'u32[]', space=smem, size = 0x4, offset = 0x4, fixed_abs, tag = 'smem constant byte address 0x4 - core index']
  #allocation1 [shape = 'u32[72,128]{1,0:T(1,128)}', space=vmem, size = 0x9000, scoped, tag = 'internal scratch']
  #allocation2 [shape = 'f32[16,128]{1,0:T(8,128)}', space=vmem, size = 0x2000, scoped, tag = 'scratch operand']
  %s0 = inlined_call_operand.vmem [shape: f32[4,8,128], index: 0, kind: input, shape index: {}]
  %s1 = inlined_call_operand.vmem [shape: bf16[2,128,384], index: 1, kind: input, shape index: {}]
  %s2 = inlined_call_operand.vmem [shape: bf16[2,128,128], index: 2, kind: input, shape index: {}]
  %s3 = inlined_call_operand.vmem [shape: bf16[2,128,256], index: 3, kind: input, shape index: {}]
  %s4 = inlined_call_operand.vmem [shape: bf16[2,256,128], index: 4, kind: input, shape index: {}]
  %s5 = inlined_call_operand.vmem [shape: f32[2,9,128], index: 5, kind: input, shape index: {}]
  %s6 = inlined_call_operand.vmem [shape: f32[2,1,256], index: 6, kind: input, shape index: {}]
  %s7 = inlined_call_operand.hbm [shape: f32[4,8,128], index: 7, kind: output, shape index: {0}]
  %s8 = inlined_call_operand.hbm [shape: f32[4,8,8], index: 8, kind: output, shape index: {1}]
  %9 = xla_tuple %s7, %s8
  %s10 = sld [smem:[#allocation0]]
  $region77: #{transformer_encoder_net.1} parent=0
    _
  %s12 = ssub.s32 1, %s10
  %s13 = scalar_select 0, %s12, %s10
  $region1: #{transformer_encoder_net.1} parent=0
    #allocation3 [shape = 'u8[16384]{0}', space=vmem, size = 0x4000, scoped, tag = 'output window, operand 0']
    #allocation4 [shape = 's32[2]{0}', space=sflag, size = 0x8, scoped, tag = 'scoped memory for transformer_encoder_net.1']
    #allocation5 [shape = 'u8[16384]{0}', space=vmem, size = 0x4000, scoped, tag = 'output window, operand 1']
    #allocation6 [shape = 's32[2]{0}', space=sflag, size = 0x8, scoped, tag = 'scoped memory for transformer_encoder_net.1']
    %14 = vsyncpa [#allocation4], 0
    %s15 = scalar_lea.sflag [#allocation4], 1
    %16 = vsyncpa %s15, 0
    %17 = vsyncpa [#allocation6], 0
    %s18 = scalar_lea.sflag [#allocation6], 1
    %19 = vsyncpa %s18, 0
    loop: start=0, step=1, limit=6
    $region2: #{transformer_encoder_net.1} parent=1 // loop_pre_header
      _
    $region3: #{transformer_encoder_net.1} parent=1 // loop_header
      %s21 = sphi 0, %s25
      %p22 = scmp.ge.s32.totalorder %s21, 6
      %s28 = sphi 0, %s40
      %s29 = sphi 0, %s36
      %s30 = sphi 0, %s28
      %s31 = sphi 0, %s29
      %s32 = sphi 0, %s30
      %s33 = sphi 0, %s31
      %s43 = sphi 0, %s45
      %s46 = sphi 0, %s43
      %s47 = sphi 0, %s46
      %s63 = sphi 0, %s47
      %s69 = sphi 0, %s71
      %s72 = sphi 0, %s69
      %s73 = sphi 0, %s72
      %s89 = sphi 0, %s73
      %s95 = sphi 0, %s97
      %s98 = sphi 0, %s95
      %s99 = sphi 0, %s98
      %s115 = sphi 0, %s99
      %s121 = sphi 0, %s123
      %s124 = sphi 0, %s121
      %s125 = sphi 0, %s124
      %s141 = sphi 0, %s125
      %s147 = sphi 0, %s149
      %s150 = sphi 0, %s147
      %s151 = sphi 0, %s150
      %s167 = sphi 0, %s151
      %s173 = sphi 0, %s175
      %s176 = sphi 0, %s173
      %s177 = sphi 0, %s176
      %s193 = sphi 0, %s177
      %s199 = sphi 0, %s201
      %s202 = sphi 0, %s199
      %s203 = sphi 0, %s202
      %s219 = sphi 0, %s203
      %s225 = sphi 0, %s227
      %s228 = sphi 0, %s225
      %s229 = sphi 0, %s228
      %s245 = sphi 0, %s229
      %s251 = sphi 0, %s253
      %s254 = sphi 0, %s251
      %s255 = sphi 0, %s254
      %s271 = sphi 0, %s255
    $region4: #{transformer_encoder_net.1} parent=1 // loop_header_branch
      %24 = sbr.rel (%p22) target = $region8
    $region5: #{transformer_encoder_net.1} parent=1 // loop_body
      %s26 = ssub.s32 %s21, 1
      %s27 = ssub.s32 %s21, 2
      %s34 = sadd.s32 1, %s29
      %p35 = scmp.ge.s32.totalorder %s34, 2
      %s36 = scalar_select %p35, 0, %s34
      %s37 = sadd.s32 1, %s28
      %s38 = scalar_select %p35, %s37, %s28
      %p39 = scmp.ge.s32.totalorder %s38, 2
      %s40 = scalar_select %p39, 0, %s38
      %s41 = ssub.s32 %s28, %s40
      %p42 = scmp.eq.s32.totalorder %s41, 0
      %s44 = sadd.s32 %s43, 1
      %s45 = scalar_select %p42, %s43, %s44
      %p48 = pneg %p42
      %p49 = scmp.eq.s32.totalorder %s21, 3
      %p50 = por %p48, %p49
      %p51 = scmp.ne.s32.totalorder %s43, %s46
      %p52 = scmp.eq.s32.totalorder %s21, 0
      %p53 = por %p51, %p52
      %p54 = scmp.ne.s32.totalorder %s43, %s46
      %p55 = scmp.eq.s32.totalorder %s26, 3
      %p56 = por %p54, %p55
      %p57 = scmp.ne.s32.totalorder %s46, %s47
      %p58 = scmp.eq.s32.totalorder %s26, 0
      %p59 = por %p57, %p58
      %p60 = scmp.ne.s32.totalorder %s46, %s47
      %p61 = scmp.eq.s32.totalorder %s27, 3
      %p62 = por %p60, %p61
      %p64 = scmp.ne.s32.totalorder %s47, %s63
      %p65 = scmp.eq.s32.totalorder %s27, 0
      %p66 = por %p64, %p65
      %s67 = ssub.s32 %s29, %s36
      %p68 = scmp.eq.s32.totalorder %s67, 0
      %s70 = sadd.s32 %s69, 1
      %s71 = scalar_select %p68, %s69, %s70
      %p74 = pneg %p68
      %p75 = scmp.eq.s32.totalorder %s21, 3
      %p76 = por %p74, %p75
      %p77 = scmp.ne.s32.totalorder %s69, %s72
      %p78 = scmp.eq.s32.totalorder %s21, 0
      %p79 = por %p77, %p78
      %p80 = scmp.ne.s32.totalorder %s69, %s72
      %p81 = scmp.eq.s32.totalorder %s26, 3
      %p82 = por %p80, %p81
      %p83 = scmp.ne.s32.totalorder %s72, %s73
      %p84 = scmp.eq.s32.totalorder %s26, 0
      %p85 = por %p83, %p84
      %p86 = scmp.ne.s32.totalorder %s72, %s73
      %p87 = scmp.eq.s32.totalorder %s27, 3
      %p88 = por %p86, %p87
      %p90 = scmp.ne.s32.totalorder %s73, %s89
      %p91 = scmp.eq.s32.totalorder %s27, 0
      %p92 = por %p90, %p91
      %s93 = ssub.s32 %s29, %s36
      %p94 = scmp.eq.s32.totalorder %s93, 0
      %s96 = sadd.s32 %s95, 1
      %s97 = scalar_select %p94, %s95, %s96
      %p100 = pneg %p94
      %p101 = scmp.eq.s32.totalorder %s21, 3
      %p102 = por %p100, %p101
      %p103 = scmp.ne.s32.totalorder %s95, %s98
      %p104 = scmp.eq.s32.totalorder %s21, 0
      %p105 = por %p103, %p104
      %p106 = scmp.ne.s32.totalorder %s95, %s98
      %p107 = scmp.eq.s32.totalorder %s26, 3
      %p108 = por %p106, %p107
      %p109 = scmp.ne.s32.totalorder %s98, %s99
      %p110 = scmp.eq.s32.totalorder %s26, 0
      %p111 = por %p109, %p110
      %p112 = scmp.ne.s32.totalorder %s98, %s99
      %p113 = scmp.eq.s32.totalorder %s27, 3
      %p114 = por %p112, %p113
      %p116 = scmp.ne.s32.totalorder %s99, %s115
      %p117 = scmp.eq.s32.totalorder %s27, 0
      %p118 = por %p116, %p117
      %s119 = ssub.s32 %s29, %s36
      %p120 = scmp.eq.s32.totalorder %s119, 0
      %s122 = sadd.s32 %s121, 1
      %s123 = scalar_select %p120, %s121, %s122
      %p126 = pneg %p120
      %p127 = scmp.eq.s32.totalorder %s21, 3
      %p128 = por %p126, %p127
      %p129 = scmp.ne.s32.totalorder %s121, %s124
      %p130 = scmp.eq.s32.totalorder %s21, 0
      %p131 = por %p129, %p130
      %p132 = scmp.ne.s32.totalorder %s121, %s124
      %p133 = scmp.eq.s32.totalorder %s26, 3
      %p134 = por %p132, %p133
      %p135 = scmp.ne.s32.totalorder %s124, %s125
      %p136 = scmp.eq.s32.totalorder %s26, 0
      %p137 = por %p135, %p136
      %p138 = scmp.ne.s32.totalorder %s124, %s125
      %p139 = scmp.eq.s32.totalorder %s27, 3
      %p140 = por %p138, %p139
      %p142 = scmp.ne.s32.totalorder %s125, %s141
      %p143 = scmp.eq.s32.totalorder %s27, 0
      %p144 = por %p142, %p143
      %s145 = ssub.s32 %s29, %s36
      %p146 = scmp.eq.s32.totalorder %s145, 0
      %s148 = sadd.s32 %s147, 1
      %s149 = scalar_select %p146, %s147, %s148
      %p152 = pneg %p146
      %p153 = scmp.eq.s32.totalorder %s21, 3
      %p154 = por %p152, %p153
      %p155 = scmp.ne.s32.totalorder %s147, %s150
      %p156 = scmp.eq.s32.totalorder %s21, 0
      %p157 = por %p155, %p156
      %p158 = scmp.ne.s32.totalorder %s147, %s150
      %p159 = scmp.eq.s32.totalorder %s26, 3
      %p160 = por %p158, %p159
      %p161 = scmp.ne.s32.totalorder %s150, %s151
      %p162 = scmp.eq.s32.totalorder %s26, 0
      %p163 = por %p161, %p162
      %p164 = scmp.ne.s32.totalorder %s150, %s151
      %p165 = scmp.eq.s32.totalorder %s27, 3
      %p166 = por %p164, %p165
      %p168 = scmp.ne.s32.totalorder %s151, %s167
      %p169 = scmp.eq.s32.totalorder %s27, 0
      %p170 = por %p168, %p169
      %s171 = ssub.s32 %s29, %s36
      %p172 = scmp.eq.s32.totalorder %s171, 0
      %s174 = sadd.s32 %s173, 1
      %s175 = scalar_select %p172, %s173, %s174
      %p178 = pneg %p172
      %p179 = scmp.eq.s32.totalorder %s21, 3
      %p180 = por %p178, %p179
      %p181 = scmp.ne.s32.totalorder %s173, %s176
      %p182 = scmp.eq.s32.totalorder %s21, 0
      %p183 = por %p181, %p182
      %p184 = scmp.ne.s32.totalorder %s173, %s176
      %p185 = scmp.eq.s32.totalorder %s26, 3
      %p186 = por %p184, %p185
      %p187 = scmp.ne.s32.totalorder %s176, %s177
      %p188 = scmp.eq.s32.totalorder %s26, 0
      %p189 = por %p187, %p188
      %p190 = scmp.ne.s32.totalorder %s176, %s177
      %p191 = scmp.eq.s32.totalorder %s27, 3
      %p192 = por %p190, %p191
      %p194 = scmp.ne.s32.totalorder %s177, %s193
      %p195 = scmp.eq.s32.totalorder %s27, 0
      %p196 = por %p194, %p195
      %s197 = ssub.s32 %s29, %s36
      %p198 = scmp.eq.s32.totalorder %s197, 0
      %s200 = sadd.s32 %s199, 1
      %s201 = scalar_select %p198, %s199, %s200
      %p204 = pneg %p198
      %p205 = scmp.eq.s32.totalorder %s21, 3
      %p206 = por %p204, %p205
      %p207 = scmp.ne.s32.totalorder %s199, %s202
      %p208 = scmp.eq.s32.totalorder %s21, 0
      %p209 = por %p207, %p208
      %p210 = scmp.ne.s32.totalorder %s199, %s202
      %p211 = scmp.eq.s32.totalorder %s26, 3
      %p212 = por %p210, %p211
      %p213 = scmp.ne.s32.totalorder %s202, %s203
      %p214 = scmp.eq.s32.totalorder %s26, 0
      %p215 = por %p213, %p214
      %p216 = scmp.ne.s32.totalorder %s202, %s203
      %p217 = scmp.eq.s32.totalorder %s27, 3
      %p218 = por %p216, %p217
      %p220 = scmp.ne.s32.totalorder %s203, %s219
      %p221 = scmp.eq.s32.totalorder %s27, 0
      %p222 = por %p220, %p221
      %s223 = ssub.s32 %s28, %s40
      %p224 = scmp.eq.s32.totalorder %s223, 0
      %s226 = sadd.s32 %s225, 1
      %s227 = scalar_select %p224, %s225, %s226
      %p230 = pneg %p224
      %p231 = scmp.eq.s32.totalorder %s21, 3
      %p232 = por %p230, %p231
      %p233 = scmp.ne.s32.totalorder %s225, %s228
      %p234 = scmp.eq.s32.totalorder %s21, 0
      %p235 = por %p233, %p234
      %p236 = scmp.ne.s32.totalorder %s225, %s228
      %p237 = scmp.eq.s32.totalorder %s26, 3
      %p238 = por %p236, %p237
      %p239 = scmp.ne.s32.totalorder %s228, %s229
      %p240 = scmp.eq.s32.totalorder %s26, 0
      %p241 = por %p239, %p240
      %p242 = scmp.ne.s32.totalorder %s228, %s229
      %p243 = scmp.eq.s32.totalorder %s27, 3
      %p244 = por %p242, %p243
      %p246 = scmp.ne.s32.totalorder %s229, %s245
      %p247 = scmp.eq.s32.totalorder %s27, 0
      %p248 = por %p246, %p247
      %s249 = ssub.s32 %s28, %s40
      %p250 = scmp.eq.s32.totalorder %s249, 0
      %s252 = sadd.s32 %s251, 1
      %s253 = scalar_select %p250, %s251, %s252
      %p256 = pneg %p250
      %p257 = scmp.eq.s32.totalorder %s21, 3
      %p258 = por %p256, %p257
      %p259 = scmp.ne.s32.totalorder %s251, %s254
      %p260 = scmp.eq.s32.totalorder %s21, 0
      %p261 = por %p259, %p260
      %p262 = scmp.ne.s32.totalorder %s251, %s254
      %p263 = scmp.eq.s32.totalorder %s26, 3
      %p264 = por %p262, %p263
      %p265 = scmp.ne.s32.totalorder %s254, %s255
      %p266 = scmp.eq.s32.totalorder %s26, 0
      %p267 = por %p265, %p266
      %p268 = scmp.ne.s32.totalorder %s254, %s255
      %p269 = scmp.eq.s32.totalorder %s27, 3
      %p270 = por %p268, %p269
      %p272 = scmp.ne.s32.totalorder %s255, %s271
      %p273 = scmp.eq.s32.totalorder %s27, 0
      %p274 = por %p272, %p273
      %p275 = scmp.le.s32.totalorder 1, %s21
      %p276 = scmp.lt.s32.totalorder %s21, 5
      %p277 = pnand %p275, %p276
      %p278 = pneg %p277
      // Predicated region
      $region9: #{transformer_encoder_net.1} parent=5 // pred_check
        _
      $region10: #{transformer_encoder_net.1} parent=5 // pred_check_branch
        %280 = sbr.rel (%p277) target = $region12
      $region11: #{transformer_encoder_net.1} parent=5 // pred_region
        %s281 = ssub.s32 %s21, 1
      $region12: #{transformer_encoder_net.1} parent=5 // pred_fallthru
        _
      %p282 = scmp.lt.s32.totalorder %s21, 4
      // Predicated region
      $region13: #{transformer_encoder_net.1} parent=5 // pred_check
        %p283 = pneg %p282
      $region14: #{transformer_encoder_net.1} parent=5 // pred_check_branch
        %285 = sbr.rel (%p283) target = $region16
      $region15: #{transformer_encoder_net.1} parent=5 // pred_region
        // Predicated region
        $region17: #{transformer_encoder_net.1} parent=15 // pred_check
          %p286 = pneg %p53
        $region18: #{transformer_encoder_net.1} parent=15 // pred_check_branch
          %288 = sbr.rel (%p286) target = $region20
        $region19: #{transformer_encoder_net.1} parent=15 // pred_region
          %s289 = smul.u32 2, %s28
          %p290 = scmp.lt.s32.totalorder %s289, 3
          %s291 = scalar_select %p290, %s289, 3
          %s292 = smul.addr %s291, 8
          %s293 = scalar_lea.vmem %s0, %s292
          %s294 = smul.u32 2, %s28
        $region20: #{transformer_encoder_net.1} parent=15 // pred_fallthru
          _
        // Predicated region
        $region21: #{transformer_encoder_net.1} parent=15 // pred_check
          %p295 = pneg %p79
        $region22: #{transformer_encoder_net.1} parent=15 // pred_check_branch
          %297 = sbr.rel (%p295) target = $region24
        $region23: #{transformer_encoder_net.1} parent=15 // pred_region
          %p298 = scmp.lt.s32.totalorder %s29, 1
          %s299 = scalar_select %p298, %s29, 1
          %s300 = smul.addr %s299, 48
          %s301 = smul.addr %s300, 4
          %s302 = scalar_lea.vmem %s1, %s301
        $region24: #{transformer_encoder_net.1} parent=15 // pred_fallthru
          _
        // Predicated region
        $region25: #{transformer_encoder_net.1} parent=15 // pred_check
          %p303 = pneg %p105
        $region26: #{transformer_encoder_net.1} parent=15 // pred_check_branch
          %305 = sbr.rel (%p303) target = $region28
        $region27: #{transformer_encoder_net.1} parent=15 // pred_region
          %p306 = scmp.lt.s32.totalorder %s29, 1
          %s307 = scalar_select %p306, %s29, 1
          %s308 = smul.addr %s307, 16
          %s309 = smul.addr %s308, 4
          %s310 = scalar_lea.vmem %s2, %s309
        $region28: #{transformer_encoder_net.1} parent=15 // pred_fallthru
          _
        // Predicated region
        $region29: #{transformer_encoder_net.1} parent=15 // pred_check
          %p311 = pneg %p131
        $region30: #{transformer_encoder_net.1} parent=15 // pred_check_branch
          %313 = sbr.rel (%p311) target = $region32
        $region31: #{transformer_encoder_net.1} parent=15 // pred_region
          %p314 = scmp.lt.s32.totalorder %s29, 1
          %s315 = scalar_select %p314, %s29, 1
          %s316 = smul.addr %s315, 32
          %s317 = smul.addr %s316, 4
          %s318 = scalar_lea.vmem %s3, %s317
        $region32: #{transformer_encoder_net.1} parent=15 // pred_fallthru
          _
        // Predicated region
        $region33: #{transformer_encoder_net.1} parent=15 // pred_check
          %p319 = pneg %p157
        $region34: #{transformer_encoder_net.1} parent=15 // pred_check_branch
          %321 = sbr.rel (%p319) target = $region36
        $region35: #{transformer_encoder_net.1} parent=15 // pred_region
          %p322 = scmp.lt.s32.totalorder %s29, 1
          %s323 = scalar_select %p322, %s29, 1
          %s324 = smul.addr %s323, 32
          %s325 = smul.addr %s324, 4
          %s326 = scalar_lea.vmem %s4, %s325
        $region36: #{transformer_encoder_net.1} parent=15 // pred_fallthru
          _
        // Predicated region
        $region37: #{transformer_encoder_net.1} parent=15 // pred_check
          %p327 = pneg %p183
        $region38: #{transformer_encoder_net.1} parent=15 // pred_check_branch
          %329 = sbr.rel (%p327) target = $region40
        $region39: #{transformer_encoder_net.1} parent=15 // pred_region
          %p330 = scmp.lt.s32.totalorder %s29, 1
          %s331 = scalar_select %p330, %s29, 1
          %s332 = smul.addr %s331, 2
          %s333 = smul.addr %s332, 8
          %s334 = scalar_lea.vmem %s5, %s333
        $region40: #{transformer_encoder_net.1} parent=15 // pred_fallthru
          _
        // Predicated region
        $region41: #{transformer_encoder_net.1} parent=15 // pred_check
          %p335 = pneg %p209
        $region42: #{transformer_encoder_net.1} parent=15 // pred_check_branch
          %337 = sbr.rel (%p335) target = $region44
        $region43: #{transformer_encoder_net.1} parent=15 // pred_region
          %p338 = scmp.lt.s32.totalorder %s29, 1
          %s339 = scalar_select %p338, %s29, 1
          %s340 = smul.addr %s339, 2
          %s341 = scalar_lea.vmem %s6, %s340
        $region44: #{transformer_encoder_net.1} parent=15 // pred_fallthru
          _
      $region16: #{transformer_encoder_net.1} parent=5 // pred_fallthru
        _
      %p342 = scmp.le.s32.totalorder 1, %s21
      %p343 = scmp.lt.s32.totalorder %s21, 5
      %p344 = pnand %p342, %p343
      %p345 = pneg %p344
      // Predicated region
      $region45: #{transformer_encoder_net.1} parent=5 // pred_check
        _
      $region46: #{transformer_encoder_net.1} parent=5 // pred_check_branch
        %347 = sbr.rel (%p344) target = $region48
      $region47: #{transformer_encoder_net.1} parent=5 // pred_region
        %s348 = ssub.s32 %s21, 1
        %s349 = smul.u32 2, %s30
        %p350 = scmp.lt.s32.totalorder %s349, 3
        %s351 = scalar_select %p350, %s349, 3
        %s352 = smul.addr %s351, 8
        %s353 = scalar_lea.vmem %s0, %s352
        %p354 = pneg %p59
        %p355 = pneg %p56
        %p356 = scmp.lt.s32.totalorder %s31, 1
        %s357 = scalar_select %p356, %s31, 1
        %s358 = smul.addr %s357, 48
        %s359 = smul.addr %s358, 4
        %s360 = scalar_lea.vmem %s1, %s359
        %p361 = pneg %p85
        %p362 = pneg %p82
        %p363 = scmp.lt.s32.totalorder %s31, 1
        %s364 = scalar_select %p363, %s31, 1
        %s365 = smul.addr %s364, 16
        %s366 = smul.addr %s365, 4
        %s367 = scalar_lea.vmem %s2, %s366
        %p368 = pneg %p111
        %p369 = pneg %p108
        %p370 = scmp.lt.s32.totalorder %s31, 1
        %s371 = scalar_select %p370, %s31, 1
        %s372 = smul.addr %s371, 32
        %s373 = smul.addr %s372, 4
        %s374 = scalar_lea.vmem %s3, %s373
        %p375 = pneg %p137
        %p376 = pneg %p134
        %p377 = scmp.lt.s32.totalorder %s31, 1
        %s378 = scalar_select %p377, %s31, 1
        %s379 = smul.addr %s378, 32
        %s380 = smul.addr %s379, 4
        %s381 = scalar_lea.vmem %s4, %s380
        %p382 = pneg %p163
        %p383 = pneg %p160
        %p384 = scmp.lt.s32.totalorder %s31, 1
        %s385 = scalar_select %p384, %s31, 1
        %s386 = smul.addr %s385, 2
        %s387 = smul.addr %s386, 8
        %s388 = scalar_lea.vmem %s5, %s387
        %p389 = pneg %p189
        %p390 = pneg %p186
        %p391 = scmp.lt.s32.totalorder %s31, 1
        %s392 = scalar_select %p391, %s31, 1
        %s393 = smul.addr %s392, 2
        %s394 = scalar_lea.vmem %s6, %s393
        %p395 = pneg %p215
        %p396 = pneg %p212
        %p397 = pneg %p241
        %p398 = pneg %p238
        %s399 = sand.u32 %s228, 1
        %s400 = scalar_lea.sflag [#allocation4], %s399
        %s401 = sand.u32 %s228, 1
        %s402 = smul.addr %s401, 16
        %s403 = scalar_lea.vmem [#allocation3], %s402
        %p404 = pneg %p267
        %p405 = pneg %p264
        %s406 = sand.u32 %s254, 1
        %s407 = scalar_lea.sflag [#allocation6], %s406
        %s408 = sand.u32 %s254, 1
        %s409 = smul.addr %s408, 16
        %s410 = scalar_lea.vmem [#allocation5], %s409
        %s411 = smul.u32 2, %s30
        %p412 = scmp.lt.s32.totalorder %s411, 3
        %s413 = scalar_select %p412, %s411, 3
        %s414 = smul.addr %s413, 8
        %s415 = scalar_lea.vmem %s0, %s414
        %s416 = smul.u32 2, %s30
        %p417 = scmp.lt.s32.totalorder %s31, 1
        %s418 = scalar_select %p417, %s31, 1
        %s419 = smul.addr %s418, 48
        %s420 = smul.addr %s419, 4
        %s421 = scalar_lea.vmem %s1, %s420
        %p422 = scmp.lt.s32.totalorder %s31, 1
        %s423 = scalar_select %p422, %s31, 1
        %s424 = smul.addr %s423, 16
        %s425 = smul.addr %s424, 4
        %s426 = scalar_lea.vmem %s2, %s425
        %p427 = scmp.lt.s32.totalorder %s31, 1
        %s428 = scalar_select %p427, %s31, 1
        %s429 = smul.addr %s428, 32
        %s430 = smul.addr %s429, 4
        %s431 = scalar_lea.vmem %s3, %s430
        %p432 = scmp.lt.s32.totalorder %s31, 1
        %s433 = scalar_select %p432, %s31, 1
        %s434 = smul.addr %s433, 32
        %s435 = smul.addr %s434, 4
        %s436 = scalar_lea.vmem %s4, %s435
        %p437 = scmp.lt.s32.totalorder %s31, 1
        %s438 = scalar_select %p437, %s31, 1
        %s439 = smul.addr %s438, 2
        %s440 = smul.addr %s439, 8
        %s441 = scalar_lea.vmem %s5, %s440
        %p442 = scmp.lt.s32.totalorder %s31, 1
        %s443 = scalar_select %p442, %s31, 1
        %s444 = smul.addr %s443, 2
        %s445 = scalar_lea.vmem %s6, %s444
        %s446 = smul.u32 2, %s30
        %s447 = smul.u32 2, %s30
        %p449 = scmp.eq.s32.totalorder %s31, 0
        // Predicated region
        $region49: #{transformer_encoder_net.1} parent=47 // pred_check
          %p450 = pneg %p449
        $region50: #{transformer_encoder_net.1} parent=47 // pred_check_branch
          %452 = sbr.rel (%p450) target = $region52
        $region51: #{transformer_encoder_net.1} parent=47 // pred_region
          %v453 = vld [vmem:[%s415] sm:$0xff]
          %v454 = vld [vmem:[%s415 + $0x8] sm:$0xff]
          %455 = vst [vmem:[#allocation2] sm:$0xff] %v453
          %456 = vst [vmem:[#allocation2 + $0x8] sm:$0xff] %v454
        $region52: #{transformer_encoder_net.1} parent=47 // pred_fallthru
          _
        %v457 = vld [vmem:[#allocation2] sm:$0xff]
        %v458 = vld [vmem:[#allocation2 + $0x8] sm:$0xff]
        %v459 = vpack.c.bf16 %v458, %v457
        %v460 = vld [vmem:[%s441] sm:$0xff]
        %v461 = vld [vmem:[%s441 + $0x8] sm:$0x1]
        %v462 = vld [vmem:[%s421] sm:$0xff]
        %v463 = vld [vmem:[%s421 + $0x8] sm:$0xf]
        %v464 = vld [vmem:[%s421 + $0xc] sm:$0xff]
        %v465 = vld [vmem:[%s421 + $0x14] sm:$0xf]
        %v466 = vld [vmem:[%s421 + $0x18] sm:$0xff]
        %v467 = vld [vmem:[%s421 + $0x20] sm:$0xf]
        %v468 = vld [vmem:[%s421 + $0x24] sm:$0xff]
        %v469 = vld [vmem:[%s421 + $0x2c] sm:$0xf]
        %v470 = vld [vmem:[%s421 + $0x30] sm:$0xff]
        %v471 = vld [vmem:[%s421 + $0x38] sm:$0xf]
        %v472 = vld [vmem:[%s421 + $0x3c] sm:$0xff]
        %v473 = vld [vmem:[%s421 + $0x44] sm:$0xf]
        %v474 = vld [vmem:[%s421 + $0x48] sm:$0xff]
        %v475 = vld [vmem:[%s421 + $0x50] sm:$0xf]
        %v476 = vld [vmem:[%s421 + $0x54] sm:$0xff]
        %v477 = vld [vmem:[%s421 + $0x5c] sm:$0xf]
        %v478 = vld [vmem:[%s421 + $0x60] sm:$0xff]
        %v479 = vld [vmem:[%s421 + $0x68] sm:$0xf]
        %v480 = vld [vmem:[%s421 + $0x6c] sm:$0xff]
        %v481 = vld [vmem:[%s421 + $0x74] sm:$0xf]
        %v482 = vld [vmem:[%s421 + $0x78] sm:$0xff]
        %v483 = vld [vmem:[%s421 + $0x80] sm:$0xf]
        %v484 = vld [vmem:[%s421 + $0x84] sm:$0xff]
        %v485 = vld [vmem:[%s421 + $0x8c] sm:$0xf]
        %v486 = vld [vmem:[%s421 + $0x90] sm:$0xff]
        %v487 = vld [vmem:[%s421 + $0x98] sm:$0xf]
        %v488 = vld [vmem:[%s421 + $0x9c] sm:$0xff]
        %v489 = vld [vmem:[%s421 + $0xa4] sm:$0xf]
        %v490 = vld [vmem:[%s421 + $0xa8] sm:$0xff]
        %v491 = vld [vmem:[%s421 + $0xb0] sm:$0xf]
        %v492 = vld [vmem:[%s421 + $0xb4] sm:$0xff]
        %v493 = vld [vmem:[%s421 + $0xbc] sm:$0xf]
        %v526 = vunpack.c.l.b16 %v462
        %v527 = vunpack.c.h.b16 %v462
        %v528 = vunpack.c.l.b16 %v463
        %v529 = vunpack.c.l.b16 %v464
        %v530 = vunpack.c.h.b16 %v464
        %v531 = vunpack.c.l.b16 %v465
        %v532 = vunpack.c.l.b16 %v466
        %v533 = vunpack.c.h.b16 %v466
        %v534 = vunpack.c.l.b16 %v467
        %v535 = vunpack.c.l.b16 %v468
        %v536 = vunpack.c.h.b16 %v468
        %v537 = vunpack.c.l.b16 %v469
        %v538 = vunpack.c.l.b16 %v470
        %v539 = vunpack.c.h.b16 %v470
        %v540 = vunpack.c.l.b16 %v471
        %v541 = vunpack.c.l.b16 %v472
        %v542 = vunpack.c.h.b16 %v472
        %v543 = vunpack.c.l.b16 %v473
        %v544 = vunpack.c.l.b16 %v474
        %v545 = vunpack.c.h.b16 %v474
        %v546 = vunpack.c.l.b16 %v475
        %v547 = vunpack.c.l.b16 %v476
        %v548 = vunpack.c.h.b16 %v476
        %v549 = vunpack.c.l.b16 %v477
        %v550 = vunpack.c.l.b16 %v478
        %v551 = vunpack.c.h.b16 %v478
        %v552 = vunpack.c.l.b16 %v479
        %v553 = vunpack.c.l.b16 %v480
        %v554 = vunpack.c.h.b16 %v480
        %v555 = vunpack.c.l.b16 %v481
        %v556 = vunpack.c.l.b16 %v482
        %v557 = vunpack.c.h.b16 %v482
        %v558 = vunpack.c.l.b16 %v483
        %v559 = vunpack.c.l.b16 %v484
        %v560 = vunpack.c.h.b16 %v484
        %v561 = vunpack.c.l.b16 %v485
        %v562 = vunpack.c.l.b16 %v486
        %v563 = vunpack.c.h.b16 %v486
        %v564 = vunpack.c.l.b16 %v487
        %v565 = vunpack.c.l.b16 %v488
        %v566 = vunpack.c.h.b16 %v488
        %v567 = vunpack.c.l.b16 %v489
        %v568 = vunpack.c.l.b16 %v490
        %v569 = vunpack.c.h.b16 %v490
        %v570 = vunpack.c.l.b16 %v491
        %v571 = vunpack.c.l.b16 %v492
        %v572 = vunpack.c.h.b16 %v492
        %v573 = vunpack.c.l.b16 %v493
        %v574 = vpack.c.b16 %v529, %v526
        %v575 = vpack.c.b16 %v530, %v527
        %v576 = vpack.c.b16 %v531, %v528
        %v577 = vpack.c.b16 %v535, %v532
        %v578 = vpack.c.b16 %v536, %v533
        %v579 = vpack.c.b16 %v537, %v534
        %v580 = vpack.c.b16 %v541, %v538
        %v581 = vpack.c.b16 %v542, %v539
        %v582 = vpack.c.b16 %v543, %v540
        %v583 = vpack.c.b16 %v547, %v544
        %v584 = vpack.c.b16 %v548, %v545
        %v585 = vpack.c.b16 %v549, %v546
        %v586 = vpack.c.b16 %v553, %v550
        %v587 = vpack.c.b16 %v554, %v551
        %v588 = vpack.c.b16 %v555, %v552
        %v589 = vpack.c.b16 %v559, %v556
        %v590 = vpack.c.b16 %v560, %v557
        %v591 = vpack.c.b16 %v561, %v558
        %v592 = vpack.c.b16 %v565, %v562
        %v593 = vpack.c.b16 %v566, %v563
        %v594 = vpack.c.b16 %v567, %v564
        %v595 = vpack.c.b16 %v571, %v568
        %v596 = vpack.c.b16 %v572, %v569
        %v597 = vpack.c.b16 %v573, %v570
        %622 = vmatpush.bf16.msra.mxu0 %v595
        %623 = vmatpush.bf16.msra.mxu0 %v592
        %624 = vmatpush.bf16.msra.mxu0 %v589
        %625 = vmatpush.bf16.msra.mxu0 %v586
        %626 = vmatpush.bf16.msra.mxu0 %v583
        %627 = vmatpush.bf16.msra.mxu0 %v580
        %628 = vmatpush.bf16.msra.mxu0 %v577
        %629 = vmatpush.bf16.msra.mxu0 %v574
        %630 = vmatmul.bf16.gmra.mxu0 %v459
        %v631 = vpop.f32.mrf.mxu0
        %v632 = vadd.f32 0.0, %v631
        %v633 = vpop.f32.mrf.mxu0
        %v634 = vadd.f32 0.0, %v633
        %635 = vdwg.mxu0
        %636 = vmatpush.bf16.msra.mxu0 %v596
        %637 = vmatpush.bf16.msra.mxu0 %v593
        %638 = vmatpush.bf16.msra.mxu0 %v590
        %639 = vmatpush.bf16.msra.mxu0 %v587
        %640 = vmatpush.bf16.msra.mxu0 %v584
        %641 = vmatpush.bf16.msra.mxu0 %v581
        %642 = vmatpush.bf16.msra.mxu0 %v578
        %643 = vmatpush.bf16.msra.mxu0 %v575
        %644 = vmatmul.bf16.gmra.mxu0 %v459
        %v645 = vpop.f32.mrf.mxu0
        %v646 = vadd.f32 0.0, %v645
        %v647 = vpop.f32.mrf.mxu0
        %v648 = vadd.f32 0.0, %v647
        %649 = vdwg.mxu0
        %650 = vmatpush.bf16.msra.mxu0 %v597
        %651 = vmatpush.bf16.msra.mxu0 %v594
        %652 = vmatpush.bf16.msra.mxu0 %v591
        %653 = vmatpush.bf16.msra.mxu0 %v588
        %654 = vmatpush.bf16.msra.mxu0 %v585
        %655 = vmatpush.bf16.msra.mxu0 %v582
        %656 = vmatpush.bf16.msra.mxu0 %v579
        %657 = vmatpush.bf16.msra.mxu0 %v576
        %658 = vmatmul.bf16.gmra.mxu0 %v459
        %v659 = vpop.f32.mrf.mxu0
        %v660 = vadd.f32 0.0, %v659
        %v661 = vpop.f32.mrf.mxu0
        %v662 = vadd.f32 0.0, %v661
        %663 = vdwg.mxu0
        %v664 = vperm.slane %v460, 0
        %v665 = vadd.f32 %v632, %v664
        %v666 = vadd.f32 %v634, %v664
        %v667 = vperm.slane %v460, 1
        %v668 = vadd.f32 %v646, %v667
        %v669 = vadd.f32 %v648, %v667
        %v670 = vperm.slane %v460, 2
        %v671 = vadd.f32 %v660, %v670
        %v672 = vadd.f32 %v662, %v670
        %675 = vrot.lane.b32.xlu0 %v665, 96
        %v676 = vpop.permute.xlu0 %675
        %677 = vrot.lane.b32.xlu0 %v666, 96
        %v678 = vpop.permute.xlu0 %677
        %681 = vrot.lane.b32.xlu0 %v665, 64
        %v682 = vpop.permute.xlu0 %681
        %683 = vrot.lane.b32.xlu0 %v666, 64
        %v684 = vpop.permute.xlu0 %683
        %687 = vrot.lane.b32.xlu0 %v665, 32
        %v688 = vpop.permute.xlu0 %687
        %689 = vrot.lane.b32.xlu0 %v666, 32
        %v690 = vpop.permute.xlu0 %689
        %v693 = vrot.slane %v682, 4
        %vm694 = vcmask 1047556
        %v695 = vsel %vm694, %v693, %v665
        %v696 = vrot.slane %v665, 4
        %v697 = vsel %vm694, %v682, %v696
        %v699 = vunpack.c.l.s4 1983009808
        %v700 = vunpack.c.0.s8 %v699
        %v701 = vperm.slane %v695, %v700
        %v703 = vunpack.c.l.s4 1983009808
        %v704 = vunpack.c.0.s8 %v703
        %v705 = vperm.slane %v697, %v704
        %v706 = vrot.slane %v688, 4
        %v707 = vsel %vm694, %v706, %v676
        %v708 = vrot.slane %v676, 4
        %v709 = vsel %vm694, %v688, %v708
        %v711 = vunpack.c.l.s4 1983009808
        %v712 = vunpack.c.0.s8 %v711
        %v713 = vperm.slane %v707, %v712
        %v715 = vunpack.c.l.s4 1983009808
        %v716 = vunpack.c.0.s8 %v715
        %v717 = vperm.slane %v709, %v716
        %v718 = vrot.slane %v713, 4
        %v719 = vsel %vm694, %v718, %v701
        %v720 = vrot.slane %v701, 4
        %v721 = vsel %vm694, %v713, %v720
        %v723 = vunpack.c.l.s4 1934713408
        %v724 = vunpack.c.0.s8 %v723
        %v725 = vperm.slane %v719, %v724
        %v727 = vunpack.c.l.s4 1934713408
        %v728 = vunpack.c.0.s8 %v727
        %v729 = vperm.slane %v721, %v728
        %v730 = vrot.slane %v717, 4
        %v731 = vsel %vm694, %v730, %v705
        %v732 = vrot.slane %v705, 4
        %v733 = vsel %vm694, %v717, %v732
        %v735 = vunpack.c.l.s4 1934713408
        %v736 = vunpack.c.0.s8 %v735
        %v737 = vperm.slane %v731, %v736
        %v739 = vunpack.c.l.s4 1934713408
        %v740 = vunpack.c.0.s8 %v739
        %v741 = vperm.slane %v733, %v740
        %v742 = vrot.slane %v725, 4
        %v743 = vsel %vm694, 0.0, %v742
        %v744 = vrot.slane %v729, 4
        %v745 = vsel %vm694, 0.0, %v744
        %v746 = vrot.slane %v737, 4
        %v747 = vsel %vm694, 0.0, %v746
        %v748 = vrot.slane %v741, 4
        %v749 = vsel %vm694, 0.0, %v748
        %v750 = vrot.slane %v684, 4
        %v751 = vsel %vm694, %v750, %v666
        %v752 = vrot.slane %v666, 4
        %v753 = vsel %vm694, %v684, %v752
        %v755 = vunpack.c.l.s4 1983009808
        %v756 = vunpack.c.0.s8 %v755
        %v757 = vperm.slane %v751, %v756
        %v759 = vunpack.c.l.s4 1983009808
        %v760 = vunpack.c.0.s8 %v759
        %v761 = vperm.slane %v753, %v760
        %v762 = vrot.slane %v690, 4
        %v763 = vsel %vm694, %v762, %v678
        %v764 = vrot.slane %v678, 4
        %v765 = vsel %vm694, %v690, %v764
        %v767 = vunpack.c.l.s4 1983009808
        %v768 = vunpack.c.0.s8 %v767
        %v769 = vperm.slane %v763, %v768
        %v771 = vunpack.c.l.s4 1983009808
        %v772 = vunpack.c.0.s8 %v771
        %v773 = vperm.slane %v765, %v772
        %v774 = vrot.slane %v769, 4
        %v775 = vsel %vm694, %v774, %v757
        %v776 = vrot.slane %v757, 4
        %v777 = vsel %vm694, %v769, %v776
        %v779 = vunpack.c.l.s4 1934713408
        %v780 = vunpack.c.0.s8 %v779
        %v781 = vperm.slane %v775, %v780
        %v783 = vunpack.c.l.s4 1934713408
        %v784 = vunpack.c.0.s8 %v783
        %v785 = vperm.slane %v777, %v784
        %v786 = vrot.slane %v773, 4
        %v787 = vsel %vm694, %v786, %v761
        %v788 = vrot.slane %v761, 4
        %v789 = vsel %vm694, %v773, %v788
        %v791 = vunpack.c.l.s4 1934713408
        %v792 = vunpack.c.0.s8 %v791
        %v793 = vperm.slane %v787, %v792
        %v795 = vunpack.c.l.s4 1934713408
        %v796 = vunpack.c.0.s8 %v795
        %v797 = vperm.slane %v789, %v796
        %v798 = vrot.slane %v781, 4
        %v799 = vsel %vm694, 0.0, %v798
        %v800 = vrot.slane %v785, 4
        %v801 = vsel %vm694, 0.0, %v800
        %v802 = vrot.slane %v793, 4
        %v803 = vsel %vm694, 0.0, %v802
        %v804 = vrot.slane %v797, 4
        %v805 = vsel %vm694, 0.0, %v804
        %v806 = vsel %vm694, %v744, %v725
        %v808 = vunpack.c.l.s4 1983009808
        %v809 = vunpack.c.0.s8 %v808
        %v810 = vperm.slane %v806, %v809
        %v811 = vrot.slane %v745, 4
        %v812 = vsel %vm694, %v811, %v743
        %v814 = vunpack.c.l.s4 1983009808
        %v815 = vunpack.c.0.s8 %v814
        %v816 = vperm.slane %v812, %v815
        %v817 = vsel %vm694, %v748, %v737
        %v819 = vunpack.c.l.s4 1983009808
        %v820 = vunpack.c.0.s8 %v819
        %v821 = vperm.slane %v817, %v820
        %v822 = vrot.slane %v749, 4
        %v823 = vsel %vm694, %v822, %v747
        %v825 = vunpack.c.l.s4 1983009808
        %v826 = vunpack.c.0.s8 %v825
        %v827 = vperm.slane %v823, %v826
        %v828 = vrot.slane %v816, 4
        %v829 = vsel %vm694, %v828, %v810
        %v830 = vrot.slane %v810, 4
        %v831 = vsel %vm694, %v816, %v830
        %v833 = vunpack.c.l.s4 1934713408
        %v834 = vunpack.c.0.s8 %v833
        %v835 = vperm.slane %v829, %v834
        %v837 = vunpack.c.l.s4 1934713408
        %v838 = vunpack.c.0.s8 %v837
        %v839 = vperm.slane %v831, %v838
        %v840 = vrot.slane %v827, 4
        %v841 = vsel %vm694, %v840, %v821
        %v842 = vrot.slane %v821, 4
        %v843 = vsel %vm694, %v827, %v842
        %v845 = vunpack.c.l.s4 1934713408
        %v846 = vunpack.c.0.s8 %v845
        %v847 = vperm.slane %v841, %v846
        %v849 = vunpack.c.l.s4 1934713408
        %v850 = vunpack.c.0.s8 %v849
        %v851 = vperm.slane %v843, %v850
        %v852 = vrot.slane %v847, 4
        %v853 = vsel %vm694, %v852, %v835
        %v854 = vrot.slane %v835, 4
        %v855 = vsel %vm694, %v847, %v854
        %v856 = vrot.slane %v851, 4
        %v857 = vsel %vm694, %v856, %v839
        %v858 = vrot.slane %v839, 4
        %v859 = vsel %vm694, %v851, %v858
        %v860 = vsel %vm694, %v800, %v781
        %v862 = vunpack.c.l.s4 1983009808
        %v863 = vunpack.c.0.s8 %v862
        %v864 = vperm.slane %v860, %v863
        %v865 = vrot.slane %v801, 4
        %v866 = vsel %vm694, %v865, %v799
        %v868 = vunpack.c.l.s4 1983009808
        %v869 = vunpack.c.0.s8 %v868
        %v870 = vperm.slane %v866, %v869
        %v871 = vsel %vm694, %v804, %v793
        %v873 = vunpack.c.l.s4 1983009808
        %v874 = vunpack.c.0.s8 %v873
        %v875 = vperm.slane %v871, %v874
        %v876 = vrot.slane %v805, 4
        %v877 = vsel %vm694, %v876, %v803
        %v879 = vunpack.c.l.s4 1983009808
        %v880 = vunpack.c.0.s8 %v879
        %v881 = vperm.slane %v877, %v880
        %v882 = vrot.slane %v870, 4
        %v883 = vsel %vm694, %v882, %v864
        %v884 = vrot.slane %v864, 4
        %v885 = vsel %vm694, %v870, %v884
        %v887 = vunpack.c.l.s4 1934713408
        %v888 = vunpack.c.0.s8 %v887
        %v889 = vperm.slane %v883, %v888
        %v891 = vunpack.c.l.s4 1934713408
        %v892 = vunpack.c.0.s8 %v891
        %v893 = vperm.slane %v885, %v892
        %v894 = vrot.slane %v881, 4
        %v895 = vsel %vm694, %v894, %v875
        %v896 = vrot.slane %v875, 4
        %v897 = vsel %vm694, %v881, %v896
        %v899 = vunpack.c.l.s4 1934713408
        %v900 = vunpack.c.0.s8 %v899
        %v901 = vperm.slane %v895, %v900
        %v903 = vunpack.c.l.s4 1934713408
        %v904 = vunpack.c.0.s8 %v903
        %v905 = vperm.slane %v897, %v904
        %v906 = vrot.slane %v901, 4
        %v907 = vsel %vm694, %v906, %v889
        %v908 = vrot.slane %v889, 4
        %v909 = vsel %vm694, %v901, %v908
        %v910 = vrot.slane %v905, 4
        %v911 = vsel %vm694, %v910, %v893
        %v912 = vrot.slane %v893, 4
        %v913 = vsel %vm694, %v905, %v912
        %v914 = vpack.c.bf16 %v853, %v853
        %v915 = vpack.c.bf16 %v855, %v855
        %v916 = vpack.c.bf16 %v857, %v857
        %v917 = vpack.c.bf16 %v859, %v859
        %v918 = vpack.c.bf16 %v907, %v907
        %v919 = vpack.c.bf16 %v909, %v909
        %v920 = vpack.c.bf16 %v911, %v911
        %v921 = vpack.c.bf16 %v913, %v913
        %924 = vrot.lane.b32.xlu0 %v668, 96
        %v925 = vpop.permute.xlu0 %924
        %926 = vrot.lane.b32.xlu0 %v669, 96
        %v927 = vpop.permute.xlu0 %926
        %930 = vrot.lane.b32.xlu0 %v668, 64
        %v931 = vpop.permute.xlu0 %930
        %932 = vrot.lane.b32.xlu0 %v669, 64
        %v933 = vpop.permute.xlu0 %932
        %936 = vrot.lane.b32.xlu0 %v668, 32
        %v937 = vpop.permute.xlu0 %936
        %938 = vrot.lane.b32.xlu0 %v669, 32
        %v939 = vpop.permute.xlu0 %938
        %v942 = vrot.slane %v931, 4
        %v943 = vsel %vm694, %v942, %v668
        %v944 = vrot.slane %v668, 4
        %v945 = vsel %vm694, %v931, %v944
        %v947 = vunpack.c.l.s4 1983009808
        %v948 = vunpack.c.0.s8 %v947
        %v949 = vperm.slane %v943, %v948
        %v951 = vunpack.c.l.s4 1983009808
        %v952 = vunpack.c.0.s8 %v951
        %v953 = vperm.slane %v945, %v952
        %v954 = vrot.slane %v937, 4
        %v955 = vsel %vm694, %v954, %v925
        %v956 = vrot.slane %v925, 4
        %v957 = vsel %vm694, %v937, %v956
        %v959 = vunpack.c.l.s4 1983009808
        %v960 = vunpack.c.0.s8 %v959
        %v961 = vperm.slane %v955, %v960
        %v963 = vunpack.c.l.s4 1983009808
        %v964 = vunpack.c.0.s8 %v963
        %v965 = vperm.slane %v957, %v964
        %v966 = vrot.slane %v961, 4
        %v967 = vsel %vm694, %v966, %v949
        %v968 = vrot.slane %v949, 4
        %v969 = vsel %vm694, %v961, %v968
        %v971 = vunpack.c.l.s4 1934713408
        %v972 = vunpack.c.0.s8 %v971
        %v973 = vperm.slane %v967, %v972
        %v975 = vunpack.c.l.s4 1934713408
        %v976 = vunpack.c.0.s8 %v975
        %v977 = vperm.slane %v969, %v976
        %v978 = vrot.slane %v965, 4
        %v979 = vsel %vm694, %v978, %v953
        %v980 = vrot.slane %v953, 4
        %v981 = vsel %vm694, %v965, %v980
        %v983 = vunpack.c.l.s4 1934713408
        %v984 = vunpack.c.0.s8 %v983
        %v985 = vperm.slane %v979, %v984
        %v987 = vunpack.c.l.s4 1934713408
        %v988 = vunpack.c.0.s8 %v987
        %v989 = vperm.slane %v981, %v988
        %v990 = vrot.slane %v973, 4
        %v991 = vsel %vm694, 0.0, %v990
        %v992 = vrot.slane %v977, 4
        %v993 = vsel %vm694, 0.0, %v992
        %v994 = vrot.slane %v985, 4
        %v995 = vsel %vm694, 0.0, %v994
        %v996 = vrot.slane %v989, 4
        %v997 = vsel %vm694, 0.0, %v996
        %v998 = vrot.slane %v933, 4
        %v999 = vsel %vm694, %v998, %v669
        %v1000 = vrot.slane %v669, 4
        %v1001 = vsel %vm694, %v933, %v1000
        %v1003 = vunpack.c.l.s4 1983009808
        %v1004 = vunpack.c.0.s8 %v1003
        %v1005 = vperm.slane %v999, %v1004
        %v1007 = vunpack.c.l.s4 1983009808
        %v1008 = vunpack.c.0.s8 %v1007
        %v1009 = vperm.slane %v1001, %v1008
        %v1010 = vrot.slane %v939, 4
        %v1011 = vsel %vm694, %v1010, %v927
        %v1012 = vrot.slane %v927, 4
        %v1013 = vsel %vm694, %v939, %v1012
        %v1015 = vunpack.c.l.s4 1983009808
        %v1016 = vunpack.c.0.s8 %v1015
        %v1017 = vperm.slane %v1011, %v1016
        %v1019 = vunpack.c.l.s4 1983009808
        %v1020 = vunpack.c.0.s8 %v1019
        %v1021 = vperm.slane %v1013, %v1020
        %v1022 = vrot.slane %v1017, 4
        %v1023 = vsel %vm694, %v1022, %v1005
        %v1024 = vrot.slane %v1005, 4
        %v1025 = vsel %vm694, %v1017, %v1024
        %v1027 = vunpack.c.l.s4 1934713408
        %v1028 = vunpack.c.0.s8 %v1027
        %v1029 = vperm.slane %v1023, %v1028
        %v1031 = vunpack.c.l.s4 1934713408
        %v1032 = vunpack.c.0.s8 %v1031
        %v1033 = vperm.slane %v1025, %v1032
        %v1034 = vrot.slane %v1021, 4
        %v1035 = vsel %vm694, %v1034, %v1009
        %v1036 = vrot.slane %v1009, 4
        %v1037 = vsel %vm694, %v1021, %v1036
        %v1039 = vunpack.c.l.s4 1934713408
        %v1040 = vunpack.c.0.s8 %v1039
        %v1041 = vperm.slane %v1035, %v1040
        %v1043 = vunpack.c.l.s4 1934713408
        %v1044 = vunpack.c.0.s8 %v1043
        %v1045 = vperm.slane %v1037, %v1044
        %v1046 = vrot.slane %v1029, 4
        %v1047 = vsel %vm694, 0.0, %v1046
        %v1048 = vrot.slane %v1033, 4
        %v1049 = vsel %vm694, 0.0, %v1048
        %v1050 = vrot.slane %v1041, 4
        %v1051 = vsel %vm694, 0.0, %v1050
        %v1052 = vrot.slane %v1045, 4
        %v1053 = vsel %vm694, 0.0, %v1052
        %v1054 = vsel %vm694, %v992, %v973
        %v1056 = vunpack.c.l.s4 1983009808
        %v1057 = vunpack.c.0.s8 %v1056
        %v1058 = vperm.slane %v1054, %v1057
        %v1059 = vrot.slane %v993, 4
        %v1060 = vsel %vm694, %v1059, %v991
        %v1062 = vunpack.c.l.s4 1983009808
        %v1063 = vunpack.c.0.s8 %v1062
        %v1064 = vperm.slane %v1060, %v1063
        %v1065 = vsel %vm694, %v996, %v985
        %v1067 = vunpack.c.l.s4 1983009808
        %v1068 = vunpack.c.0.s8 %v1067
        %v1069 = vperm.slane %v1065, %v1068
        %v1070 = vrot.slane %v997, 4
        %v1071 = vsel %vm694, %v1070, %v995
        %v1073 = vunpack.c.l.s4 1983009808
        %v1074 = vunpack.c.0.s8 %v1073
        %v1075 = vperm.slane %v1071, %v1074
        %v1076 = vrot.slane %v1064, 4
        %v1077 = vsel %vm694, %v1076, %v1058
        %v1078 = vrot.slane %v1058, 4
        %v1079 = vsel %vm694, %v1064, %v1078
        %v1081 = vunpack.c.l.s4 1934713408
        %v1082 = vunpack.c.0.s8 %v1081
        %v1083 = vperm.slane %v1077, %v1082
        %v1085 = vunpack.c.l.s4 1934713408
        %v1086 = vunpack.c.0.s8 %v1085
        %v1087 = vperm.slane %v1079, %v1086
        %v1088 = vrot.slane %v1075, 4
        %v1089 = vsel %vm694, %v1088, %v1069
        %v1090 = vrot.slane %v1069, 4
        %v1091 = vsel %vm694, %v1075, %v1090
        %v1093 = vunpack.c.l.s4 1934713408
        %v1094 = vunpack.c.0.s8 %v1093
        %v1095 = vperm.slane %v1089, %v1094
        %v1097 = vunpack.c.l.s4 1934713408
        %v1098 = vunpack.c.0.s8 %v1097
        %v1099 = vperm.slane %v1091, %v1098
        %v1100 = vrot.slane %v1095, 4
        %v1101 = vsel %vm694, %v1100, %v1083
        %v1102 = vrot.slane %v1083, 4
        %v1103 = vsel %vm694, %v1095, %v1102
        %v1104 = vrot.slane %v1099, 4
        %v1105 = vsel %vm694, %v1104, %v1087
        %v1106 = vrot.slane %v1087, 4
        %v1107 = vsel %vm694, %v1099, %v1106
        %v1108 = vsel %vm694, %v1048, %v1029
        %v1110 = vunpack.c.l.s4 1983009808
        %v1111 = vunpack.c.0.s8 %v1110
        %v1112 = vperm.slane %v1108, %v1111
        %v1113 = vrot.slane %v1049, 4
        %v1114 = vsel %vm694, %v1113, %v1047
        %v1116 = vunpack.c.l.s4 1983009808
        %v1117 = vunpack.c.0.s8 %v1116
        %v1118 = vperm.slane %v1114, %v1117
        %v1119 = vsel %vm694, %v1052, %v1041
        %v1121 = vunpack.c.l.s4 1983009808
        %v1122 = vunpack.c.0.s8 %v1121
        %v1123 = vperm.slane %v1119, %v1122
        %v1124 = vrot.slane %v1053, 4
        %v1125 = vsel %vm694, %v1124, %v1051
        %v1127 = vunpack.c.l.s4 1983009808
        %v1128 = vunpack.c.0.s8 %v1127
        %v1129 = vperm.slane %v1125, %v1128
        %v1130 = vrot.slane %v1118, 4
        %v1131 = vsel %vm694, %v1130, %v1112
        %v1132 = vrot.slane %v1112, 4
        %v1133 = vsel %vm694, %v1118, %v1132
        %v1135 = vunpack.c.l.s4 1934713408
        %v1136 = vunpack.c.0.s8 %v1135
        %v1137 = vperm.slane %v1131, %v1136
        %v1139 = vunpack.c.l.s4 1934713408
        %v1140 = vunpack.c.0.s8 %v1139
        %v1141 = vperm.slane %v1133, %v1140
        %v1142 = vrot.slane %v1129, 4
        %v1143 = vsel %vm694, %v1142, %v1123
        %v1144 = vrot.slane %v1123, 4
        %v1145 = vsel %vm694, %v1129, %v1144
        %v1147 = vunpack.c.l.s4 1934713408
        %v1148 = vunpack.c.0.s8 %v1147
        %v1149 = vperm.slane %v1143, %v1148
        %v1151 = vunpack.c.l.s4 1934713408
        %v1152 = vunpack.c.0.s8 %v1151
        %v1153 = vperm.slane %v1145, %v1152
        %v1154 = vrot.slane %v1149, 4
        %v1155 = vsel %vm694, %v1154, %v1137
        %v1156 = vrot.slane %v1137, 4
        %v1157 = vsel %vm694, %v1149, %v1156
        %v1158 = vrot.slane %v1153, 4
        %v1159 = vsel %vm694, %v1158, %v1141
        %v1160 = vrot.slane %v1141, 4
        %v1161 = vsel %vm694, %v1153, %v1160
        %v1162 = vpack.c.bf16 %v1101, %v1101
        %v1163 = vpack.c.bf16 %v1103, %v1103
        %v1164 = vpack.c.bf16 %v1105, %v1105
        %v1165 = vpack.c.bf16 %v1107, %v1107
        %v1166 = vpack.c.bf16 %v1155, %v1155
        %v1167 = vpack.c.bf16 %v1157, %v1157
        %v1168 = vpack.c.bf16 %v1159, %v1159
        %v1169 = vpack.c.bf16 %v1161, %v1161
        %1172 = vrot.lane.b32.xlu0 %v671, 96
        %v1173 = vpop.permute.xlu0 %1172
        %1174 = vrot.lane.b32.xlu0 %v672, 96
        %v1175 = vpop.permute.xlu0 %1174
        %1178 = vrot.lane.b32.xlu0 %v671, 64
        %v1179 = vpop.permute.xlu0 %1178
        %1180 = vrot.lane.b32.xlu0 %v672, 64
        %v1181 = vpop.permute.xlu0 %1180
        %1184 = vrot.lane.b32.xlu0 %v671, 32
        %v1185 = vpop.permute.xlu0 %1184
        %1186 = vrot.lane.b32.xlu0 %v672, 32
        %v1187 = vpop.permute.xlu0 %1186
        %v1190 = vrot.slane %v1179, 4
        %v1191 = vsel %vm694, %v1190, %v671
        %v1192 = vrot.slane %v671, 4
        %v1193 = vsel %vm694, %v1179, %v1192
        %v1195 = vunpack.c.l.s4 1983009808
        %v1196 = vunpack.c.0.s8 %v1195
        %v1197 = vperm.slane %v1191, %v1196
        %v1199 = vunpack.c.l.s4 1983009808
        %v1200 = vunpack.c.0.s8 %v1199
        %v1201 = vperm.slane %v1193, %v1200
        %v1202 = vrot.slane %v1185, 4
        %v1203 = vsel %vm694, %v1202, %v1173
        %v1204 = vrot.slane %v1173, 4
        %v1205 = vsel %vm694, %v1185, %v1204
        %v1207 = vunpack.c.l.s4 1983009808
        %v1208 = vunpack.c.0.s8 %v1207
        %v1209 = vperm.slane %v1203, %v1208
        %v1211 = vunpack.c.l.s4 1983009808
        %v1212 = vunpack.c.0.s8 %v1211
        %v1213 = vperm.slane %v1205, %v1212
        %v1214 = vrot.slane %v1209, 4
        %v1215 = vsel %vm694, %v1214, %v1197
        %v1216 = vrot.slane %v1197, 4
        %v1217 = vsel %vm694, %v1209, %v1216
        %v1219 = vunpack.c.l.s4 1934713408
        %v1220 = vunpack.c.0.s8 %v1219
        %v1221 = vperm.slane %v1215, %v1220
        %v1223 = vunpack.c.l.s4 1934713408
        %v1224 = vunpack.c.0.s8 %v1223
        %v1225 = vperm.slane %v1217, %v1224
        %v1226 = vrot.slane %v1213, 4
        %v1227 = vsel %vm694, %v1226, %v1201
        %v1228 = vrot.slane %v1201, 4
        %v1229 = vsel %vm694, %v1213, %v1228
        %v1231 = vunpack.c.l.s4 1934713408
        %v1232 = vunpack.c.0.s8 %v1231
        %v1233 = vperm.slane %v1227, %v1232
        %v1235 = vunpack.c.l.s4 1934713408
        %v1236 = vunpack.c.0.s8 %v1235
        %v1237 = vperm.slane %v1229, %v1236
        %v1238 = vrot.slane %v1221, 4
        %v1239 = vsel %vm694, 0.0, %v1238
        %v1240 = vrot.slane %v1225, 4
        %v1241 = vsel %vm694, 0.0, %v1240
        %v1242 = vrot.slane %v1233, 4
        %v1243 = vsel %vm694, 0.0, %v1242
        %v1244 = vrot.slane %v1237, 4
        %v1245 = vsel %vm694, 0.0, %v1244
        %v1246 = vrot.slane %v1181, 4
        %v1247 = vsel %vm694, %v1246, %v672
        %v1248 = vrot.slane %v672, 4
        %v1249 = vsel %vm694, %v1181, %v1248
        %v1251 = vunpack.c.l.s4 1983009808
        %v1252 = vunpack.c.0.s8 %v1251
        %v1253 = vperm.slane %v1247, %v1252
        %v1255 = vunpack.c.l.s4 1983009808
        %v1256 = vunpack.c.0.s8 %v1255
        %v1257 = vperm.slane %v1249, %v1256
        %v1258 = vrot.slane %v1187, 4
        %v1259 = vsel %vm694, %v1258, %v1175
        %v1260 = vrot.slane %v1175, 4
        %v1261 = vsel %vm694, %v1187, %v1260
        %v1263 = vunpack.c.l.s4 1983009808
        %v1264 = vunpack.c.0.s8 %v1263
        %v1265 = vperm.slane %v1259, %v1264
        %v1267 = vunpack.c.l.s4 1983009808
        %v1268 = vunpack.c.0.s8 %v1267
        %v1269 = vperm.slane %v1261, %v1268
        %v1270 = vrot.slane %v1265, 4
        %v1271 = vsel %vm694, %v1270, %v1253
        %v1272 = vrot.slane %v1253, 4
        %v1273 = vsel %vm694, %v1265, %v1272
        %v1275 = vunpack.c.l.s4 1934713408
        %v1276 = vunpack.c.0.s8 %v1275
        %v1277 = vperm.slane %v1271, %v1276
        %v1279 = vunpack.c.l.s4 1934713408
        %v1280 = vunpack.c.0.s8 %v1279
        %v1281 = vperm.slane %v1273, %v1280
        %v1282 = vrot.slane %v1269, 4
        %v1283 = vsel %vm694, %v1282, %v1257
        %v1284 = vrot.slane %v1257, 4
        %v1285 = vsel %vm694, %v1269, %v1284
        %v1287 = vunpack.c.l.s4 1934713408
        %v1288 = vunpack.c.0.s8 %v1287
        %v1289 = vperm.slane %v1283, %v1288
        %v1291 = vunpack.c.l.s4 1934713408
        %v1292 = vunpack.c.0.s8 %v1291
        %v1293 = vperm.slane %v1285, %v1292
        %v1294 = vrot.slane %v1277, 4
        %v1295 = vsel %vm694, 0.0, %v1294
        %v1296 = vrot.slane %v1281, 4
        %v1297 = vsel %vm694, 0.0, %v1296
        %v1298 = vrot.slane %v1289, 4
        %v1299 = vsel %vm694, 0.0, %v1298
        %v1300 = vrot.slane %v1293, 4
        %v1301 = vsel %vm694, 0.0, %v1300
        %v1302 = vsel %vm694, %v1240, %v1221
        %v1304 = vunpack.c.l.s4 1983009808
        %v1305 = vunpack.c.0.s8 %v1304
        %v1306 = vperm.slane %v1302, %v1305
        %v1307 = vrot.slane %v1241, 4
        %v1308 = vsel %vm694, %v1307, %v1239
        %v1310 = vunpack.c.l.s4 1983009808
        %v1311 = vunpack.c.0.s8 %v1310
        %v1312 = vperm.slane %v1308, %v1311
        %v1313 = vsel %vm694, %v1244, %v1233
        %v1315 = vunpack.c.l.s4 1983009808
        %v1316 = vunpack.c.0.s8 %v1315
        %v1317 = vperm.slane %v1313, %v1316
        %v1318 = vrot.slane %v1245, 4
        %v1319 = vsel %vm694, %v1318, %v1243
        %v1321 = vunpack.c.l.s4 1983009808
        %v1322 = vunpack.c.0.s8 %v1321
        %v1323 = vperm.slane %v1319, %v1322
        %v1324 = vrot.slane %v1312, 4
        %v1325 = vsel %vm694, %v1324, %v1306
        %v1326 = vrot.slane %v1306, 4
        %v1327 = vsel %vm694, %v1312, %v1326
        %v1329 = vunpack.c.l.s4 1934713408
        %v1330 = vunpack.c.0.s8 %v1329
        %v1331 = vperm.slane %v1325, %v1330
        %v1333 = vunpack.c.l.s4 1934713408
        %v1334 = vunpack.c.0.s8 %v1333
        %v1335 = vperm.slane %v1327, %v1334
        %v1336 = vrot.slane %v1323, 4
        %v1337 = vsel %vm694, %v1336, %v1317
        %v1338 = vrot.slane %v1317, 4
        %v1339 = vsel %vm694, %v1323, %v1338
        %v1341 = vunpack.c.l.s4 1934713408
        %v1342 = vunpack.c.0.s8 %v1341
        %v1343 = vperm.slane %v1337, %v1342
        %v1345 = vunpack.c.l.s4 1934713408
        %v1346 = vunpack.c.0.s8 %v1345
        %v1347 = vperm.slane %v1339, %v1346
        %v1348 = vrot.slane %v1343, 4
        %v1349 = vsel %vm694, %v1348, %v1331
        %v1350 = vrot.slane %v1331, 4
        %v1351 = vsel %vm694, %v1343, %v1350
        %v1352 = vrot.slane %v1347, 4
        %v1353 = vsel %vm694, %v1352, %v1335
        %v1354 = vrot.slane %v1335, 4
        %v1355 = vsel %vm694, %v1347, %v1354
        %v1356 = vsel %vm694, %v1296, %v1277
        %v1358 = vunpack.c.l.s4 1983009808
        %v1359 = vunpack.c.0.s8 %v1358
        %v1360 = vperm.slane %v1356, %v1359
        %v1361 = vrot.slane %v1297, 4
        %v1362 = vsel %vm694, %v1361, %v1295
        %v1364 = vunpack.c.l.s4 1983009808
        %v1365 = vunpack.c.0.s8 %v1364
        %v1366 = vperm.slane %v1362, %v1365
        %v1367 = vsel %vm694, %v1300, %v1289
        %v1369 = vunpack.c.l.s4 1983009808
        %v1370 = vunpack.c.0.s8 %v1369
        %v1371 = vperm.slane %v1367, %v1370
        %v1372 = vrot.slane %v1301, 4
        %v1373 = vsel %vm694, %v1372, %v1299
        %v1375 = vunpack.c.l.s4 1983009808
        %v1376 = vunpack.c.0.s8 %v1375
        %v1377 = vperm.slane %v1373, %v1376
        %v1378 = vrot.slane %v1366, 4
        %v1379 = vsel %vm694, %v1378, %v1360
        %v1380 = vrot.slane %v1360, 4
        %v1381 = vsel %vm694, %v1366, %v1380
        %v1383 = vunpack.c.l.s4 1934713408
        %v1384 = vunpack.c.0.s8 %v1383
        %v1385 = vperm.slane %v1379, %v1384
        %v1387 = vunpack.c.l.s4 1934713408
        %v1388 = vunpack.c.0.s8 %v1387
        %v1389 = vperm.slane %v1381, %v1388
        %v1390 = vrot.slane %v1377, 4
        %v1391 = vsel %vm694, %v1390, %v1371
        %v1392 = vrot.slane %v1371, 4
        %v1393 = vsel %vm694, %v1377, %v1392
        %v1395 = vunpack.c.l.s4 1934713408
        %v1396 = vunpack.c.0.s8 %v1395
        %v1397 = vperm.slane %v1391, %v1396
        %v1399 = vunpack.c.l.s4 1934713408
        %v1400 = vunpack.c.0.s8 %v1399
        %v1401 = vperm.slane %v1393, %v1400
        %v1402 = vrot.slane %v1397, 4
        %v1403 = vsel %vm694, %v1402, %v1385
        %v1404 = vrot.slane %v1385, 4
        %v1405 = vsel %vm694, %v1397, %v1404
        %v1406 = vrot.slane %v1401, 4
        %v1407 = vsel %vm694, %v1406, %v1389
        %v1408 = vrot.slane %v1389, 4
        %v1409 = vsel %vm694, %v1401, %v1408
        %v1410 = vpack.c.bf16 %v1349, %v1349
        %v1411 = vpack.c.bf16 %v1351, %v1351
        %v1412 = vpack.c.bf16 %v1353, %v1353
        %v1413 = vpack.c.bf16 %v1355, %v1355
        %v1414 = vpack.c.bf16 %v1403, %v1403
        %v1415 = vpack.c.bf16 %v1405, %v1405
        %v1416 = vpack.c.bf16 %v1407, %v1407
        %v1417 = vpack.c.bf16 %v1409, %v1409
        %vm1418 = vcmask 261120
        %v1420 = vsel %vm1418, %v914, 0
        %v1423 = vsel %vm1418, %v1162, 0
        %1425 = vmatpush.bf16.xpose.msra.mxu0 0
        %1426 = vmatpush.bf16.xpose.msra.mxu0 0
        %1427 = vmatpush.bf16.xpose.msra.mxu0 0
        %1428 = vmatpush.bf16.xpose.msra.mxu0 0
        %1429 = vmatpush.bf16.xpose.msra.mxu0 0
        %1430 = vmatpush.bf16.xpose.msra.mxu0 0
        %1431 = vmatpush.bf16.xpose.msra.mxu0 0
        %1432 = vmatpush.bf16.xpose.msra.mxu0 %v1423
        %1433 = vmatmul.bf16.gmra.mxu0 %v1420
        %v1434 = vpop.f32.mrf.mxu0
        %v1435 = vadd.f32 0.0, %v1434
        %v1436 = vpop.f32.mrf.mxu0
        %1437 = vdwg.mxu0
        %v1439 = vsel %vm1418, %v915, 0
        %v1442 = vsel %vm1418, %v1163, 0
        %1444 = vmatpush.bf16.xpose.msra.mxu0 0
        %1445 = vmatpush.bf16.xpose.msra.mxu0 0
        %1446 = vmatpush.bf16.xpose.msra.mxu0 0
        %1447 = vmatpush.bf16.xpose.msra.mxu0 0
        %1448 = vmatpush.bf16.xpose.msra.mxu0 0
        %1449 = vmatpush.bf16.xpose.msra.mxu0 0
        %1450 = vmatpush.bf16.xpose.msra.mxu0 0
        %1451 = vmatpush.bf16.xpose.msra.mxu0 %v1442
        %1452 = vmatmul.bf16.gmra.mxu0 %v1439
        %v1453 = vpop.f32.mrf.mxu0
        %v1454 = vadd.f32 0.0, %v1453
        %v1455 = vpop.f32.mrf.mxu0
        %1456 = vdwg.mxu0
        %v1458 = vsel %vm1418, %v916, 0
        %v1461 = vsel %vm1418, %v1164, 0
        %1463 = vmatpush.bf16.xpose.msra.mxu0 0
        %1464 = vmatpush.bf16.xpose.msra.mxu0 0
        %1465 = vmatpush.bf16.xpose.msra.mxu0 0
        %1466 = vmatpush.bf16.xpose.msra.mxu0 0
        %1467 = vmatpush.bf16.xpose.msra.mxu0 0
        %1468 = vmatpush.bf16.xpose.msra.mxu0 0
        %1469 = vmatpush.bf16.xpose.msra.mxu0 0
        %1470 = vmatpush.bf16.xpose.msra.mxu0 %v1461
        %1471 = vmatmul.bf16.gmra.mxu0 %v1458
        %v1472 = vpop.f32.mrf.mxu0
        %v1473 = vadd.f32 0.0, %v1472
        %v1474 = vpop.f32.mrf.mxu0
        %1475 = vdwg.mxu0
        %v1477 = vsel %vm1418, %v917, 0
        %v1480 = vsel %vm1418, %v1165, 0
        %1482 = vmatpush.bf16.xpose.msra.mxu0 0
        %1483 = vmatpush.bf16.xpose.msra.mxu0 0
        %1484 = vmatpush.bf16.xpose.msra.mxu0 0
        %1485 = vmatpush.bf16.xpose.msra.mxu0 0
        %1486 = vmatpush.bf16.xpose.msra.mxu0 0
        %1487 = vmatpush.bf16.xpose.msra.mxu0 0
        %1488 = vmatpush.bf16.xpose.msra.mxu0 0
        %1489 = vmatpush.bf16.xpose.msra.mxu0 %v1480
        %1490 = vmatmul.bf16.gmra.mxu0 %v1477
        %v1491 = vpop.f32.mrf.mxu0
        %v1492 = vadd.f32 0.0, %v1491
        %v1493 = vpop.f32.mrf.mxu0
        %1494 = vdwg.mxu0
        %v1496 = vsel %vm1418, %v918, 0
        %v1499 = vsel %vm1418, %v1166, 0
        %1501 = vmatpush.bf16.xpose.msra.mxu0 0
        %1502 = vmatpush.bf16.xpose.msra.mxu0 0
        %1503 = vmatpush.bf16.xpose.msra.mxu0 0
        %1504 = vmatpush.bf16.xpose.msra.mxu0 0
        %1505 = vmatpush.bf16.xpose.msra.mxu0 0
        %1506 = vmatpush.bf16.xpose.msra.mxu0 0
        %1507 = vmatpush.bf16.xpose.msra.mxu0 0
        %1508 = vmatpush.bf16.xpose.msra.mxu0 %v1499
        %1509 = vmatmul.bf16.gmra.mxu0 %v1496
        %v1510 = vpop.f32.mrf.mxu0
        %v1511 = vadd.f32 0.0, %v1510
        %v1512 = vpop.f32.mrf.mxu0
        %1513 = vdwg.mxu0
        %v1515 = vsel %vm1418, %v919, 0
        %v1518 = vsel %vm1418, %v1167, 0
        %1520 = vmatpush.bf16.xpose.msra.mxu0 0
        %1521 = vmatpush.bf16.xpose.msra.mxu0 0
        %1522 = vmatpush.bf16.xpose.msra.mxu0 0
        %1523 = vmatpush.bf16.xpose.msra.mxu0 0
        %1524 = vmatpush.bf16.xpose.msra.mxu0 0
        %1525 = vmatpush.bf16.xpose.msra.mxu0 0
        %1526 = vmatpush.bf16.xpose.msra.mxu0 0
        %1527 = vmatpush.bf16.xpose.msra.mxu0 %v1518
        %1528 = vmatmul.bf16.gmra.mxu0 %v1515
        %v1529 = vpop.f32.mrf.mxu0
        %v1530 = vadd.f32 0.0, %v1529
        %v1531 = vpop.f32.mrf.mxu0
        %1532 = vdwg.mxu0
        %v1534 = vsel %vm1418, %v920, 0
        %v1537 = vsel %vm1418, %v1168, 0
        %1539 = vmatpush.bf16.xpose.msra.mxu0 0
        %1540 = vmatpush.bf16.xpose.msra.mxu0 0
        %1541 = vmatpush.bf16.xpose.msra.mxu0 0
        %1542 = vmatpush.bf16.xpose.msra.mxu0 0
        %1543 = vmatpush.bf16.xpose.msra.mxu0 0
        %1544 = vmatpush.bf16.xpose.msra.mxu0 0
        %1545 = vmatpush.bf16.xpose.msra.mxu0 0
        %1546 = vmatpush.bf16.xpose.msra.mxu0 %v1537
        %1547 = vmatmul.bf16.gmra.mxu0 %v1534
        %v1548 = vpop.f32.mrf.mxu0
        %v1549 = vadd.f32 0.0, %v1548
        %v1550 = vpop.f32.mrf.mxu0
        %1551 = vdwg.mxu0
        %v1553 = vsel %vm1418, %v921, 0
        %v1556 = vsel %vm1418, %v1169, 0
        %1558 = vmatpush.bf16.xpose.msra.mxu0 0
        %1559 = vmatpush.bf16.xpose.msra.mxu0 0
        %1560 = vmatpush.bf16.xpose.msra.mxu0 0
        %1561 = vmatpush.bf16.xpose.msra.mxu0 0
        %1562 = vmatpush.bf16.xpose.msra.mxu0 0
        %1563 = vmatpush.bf16.xpose.msra.mxu0 0
        %1564 = vmatpush.bf16.xpose.msra.mxu0 0
        %1565 = vmatpush.bf16.xpose.msra.mxu0 %v1556
        %1566 = vmatmul.bf16.gmra.mxu0 %v1553
        %v1567 = vpop.f32.mrf.mxu0
        %v1568 = vadd.f32 0.0, %v1567
        %v1569 = vpop.f32.mrf.mxu0
        %1570 = vdwg.mxu0
        %v1571 = vmul.f32 %v1435, 0.17677669
        %v1572 = vmul.f32 %v1454, 0.17677669
        %v1573 = vmul.f32 %v1473, 0.17677669
        %v1574 = vmul.f32 %v1492, 0.17677669
        %v1575 = vmul.f32 %v1511, 0.17677669
        %v1576 = vmul.f32 %v1530, 0.17677669
        %v1577 = vmul.f32 %v1549, 0.17677669
        %v1578 = vmul.f32 %v1568, 0.17677669
        %vm1579 = vcmask 64512
        %v1580 = vsel %vm1579, %v1571, -inf
        %1581 = vmax.xlane.f32.xlu0 %v1580
        %v1582 = vpop.xlane.xlu0 %1581
        %v1583 = vsel %vm1579, %v1572, -inf
        %1584 = vmax.xlane.f32.xlu0 %v1583
        %v1585 = vpop.xlane.xlu0 %1584
        %v1586 = vsel %vm1579, %v1573, -inf
        %1587 = vmax.xlane.f32.xlu0 %v1586
        %v1588 = vpop.xlane.xlu0 %1587
        %v1589 = vsel %vm1579, %v1574, -inf
        %1590 = vmax.xlane.f32.xlu0 %v1589
        %v1591 = vpop.xlane.xlu0 %1590
        %v1592 = vsel %vm1579, %v1575, -inf
        %1593 = vmax.xlane.f32.xlu0 %v1592
        %v1594 = vpop.xlane.xlu0 %1593
        %v1595 = vsel %vm1579, %v1576, -inf
        %1596 = vmax.xlane.f32.xlu0 %v1595
        %v1597 = vpop.xlane.xlu0 %1596
        %v1598 = vsel %vm1579, %v1577, -inf
        %1599 = vmax.xlane.f32.xlu0 %v1598
        %v1600 = vpop.xlane.xlu0 %1599
        %v1601 = vsel %vm1579, %v1578, -inf
        %1602 = vmax.xlane.f32.xlu0 %v1601
        %v1603 = vpop.xlane.xlu0 %1602
        %v1604 = vsub.f32 %v1571, %v1582
        %v1605 = vsub.f32 %v1572, %v1585
        %v1606 = vsub.f32 %v1573, %v1588
        %v1607 = vsub.f32 %v1574, %v1591
        %v1608 = vsub.f32 %v1575, %v1594
        %v1609 = vsub.f32 %v1576, %v1597
        %v1610 = vsub.f32 %v1577, %v1600
        %v1611 = vsub.f32 %v1578, %v1603
        %v1612 = vmul.f32 %v1604, 1.442695
        %v1613 = vpow.pop %v1612
        %v1614 = vmul.f32 %v1605, 1.442695
        %v1615 = vpow.pop %v1614
        %v1616 = vmul.f32 %v1606, 1.442695
        %v1617 = vpow.pop %v1616
        %v1618 = vmul.f32 %v1607, 1.442695
        %v1619 = vpow.pop %v1618
        %v1620 = vmul.f32 %v1608, 1.442695
        %v1621 = vpow.pop %v1620
        %v1622 = vmul.f32 %v1609, 1.442695
        %v1623 = vpow.pop %v1622
        %v1624 = vmul.f32 %v1610, 1.442695
        %v1625 = vpow.pop %v1624
        %v1626 = vmul.f32 %v1611, 1.442695
        %v1627 = vpow.pop %v1626
        %v1628 = vsel %vm1579, %v1613, 0.0
        %1629 = vadd.xlane.f32.xlu0 %v1628
        %v1630 = vpop.xlane.xlu0 %1629
        %v1631 = vsel %vm1579, %v1615, 0.0
        %1632 = vadd.xlane.f32.xlu0 %v1631
        %v1633 = vpop.xlane.xlu0 %1632
        %v1634 = vsel %vm1579, %v1617, 0.0
        %1635 = vadd.xlane.f32.xlu0 %v1634
        %v1636 = vpop.xlane.xlu0 %1635
        %v1637 = vsel %vm1579, %v1619, 0.0
        %1638 = vadd.xlane.f32.xlu0 %v1637
        %v1639 = vpop.xlane.xlu0 %1638
        %v1640 = vsel %vm1579, %v1621, 0.0
        %1641 = vadd.xlane.f32.xlu0 %v1640
        %v1642 = vpop.xlane.xlu0 %1641
        %v1643 = vsel %vm1579, %v1623, 0.0
        %1644 = vadd.xlane.f32.xlu0 %v1643
        %v1645 = vpop.xlane.xlu0 %1644
        %v1646 = vsel %vm1579, %v1625, 0.0
        %1647 = vadd.xlane.f32.xlu0 %v1646
        %v1648 = vpop.xlane.xlu0 %1647
        %v1649 = vsel %vm1579, %v1627, 0.0
        %1650 = vadd.xlane.f32.xlu0 %v1649
        %v1651 = vpop.xlane.xlu0 %1650
        %v1652 = vrcp.pop %v1630
        %v1653 = vmul.f32 %v1630, %v1652
        %v1654 = vsub.f32 1.0, %v1653
        %v1655 = vmul.f32 %v1652, %v1654
        %v1656 = vadd.f32 %v1652, %v1655
        %vm1657 = vweird.f32 %v1630
        %vm1658 = vweird.f32 %v1652
        %vm1659 = vmor %vm1657, %vm1658
        %v1660 = vsel %vm1659, %v1652, %v1656
        %v1661 = vand.u32 2147483647, %v1630
        %vm1662 = vcmp.eq.f32.partialorder %v1661, 8.507059e+37
        %v1663 = vand.u32 %v1630, 2147483648
        %v1664 = vor.u32 1.1754944e-38, %v1663
        %v1665 = vsel %vm1662, %v1664, %v1660
        %v1666 = vmul.f32 %v1613, %v1665
        %v1667 = vrcp.pop %v1633
        %v1668 = vmul.f32 %v1633, %v1667
        %v1669 = vsub.f32 1.0, %v1668
        %v1670 = vmul.f32 %v1667, %v1669
        %v1671 = vadd.f32 %v1667, %v1670
        %vm1672 = vweird.f32 %v1633
        %vm1673 = vweird.f32 %v1667
        %vm1674 = vmor %vm1672, %vm1673
        %v1675 = vsel %vm1674, %v1667, %v1671
        %v1676 = vand.u32 2147483647, %v1633
        %vm1677 = vcmp.eq.f32.partialorder %v1676, 8.507059e+37
        %v1678 = vand.u32 %v1633, 2147483648
        %v1679 = vor.u32 1.1754944e-38, %v1678
        %v1680 = vsel %vm1677, %v1679, %v1675
        %v1681 = vmul.f32 %v1615, %v1680
        %v1682 = vrcp.pop %v1636
        %v1683 = vmul.f32 %v1636, %v1682
        %v1684 = vsub.f32 1.0, %v1683
        %v1685 = vmul.f32 %v1682, %v1684
        %v1686 = vadd.f32 %v1682, %v1685
        %vm1687 = vweird.f32 %v1636
        %vm1688 = vweird.f32 %v1682
        %vm1689 = vmor %vm1687, %vm1688
        %v1690 = vsel %vm1689, %v1682, %v1686
        %v1691 = vand.u32 2147483647, %v1636
        %vm1692 = vcmp.eq.f32.partialorder %v1691, 8.507059e+37
        %v1693 = vand.u32 %v1636, 2147483648
        %v1694 = vor.u32 1.1754944e-38, %v1693
        %v1695 = vsel %vm1692, %v1694, %v1690
        %v1696 = vmul.f32 %v1617, %v1695
        %v1697 = vrcp.pop %v1639
        %v1698 = vmul.f32 %v1639, %v1697
        %v1699 = vsub.f32 1.0, %v1698
        %v1700 = vmul.f32 %v1697, %v1699
        %v1701 = vadd.f32 %v1697, %v1700
        %vm1702 = vweird.f32 %v1639
        %vm1703 = vweird.f32 %v1697
        %vm1704 = vmor %vm1702, %vm1703
        %v1705 = vsel %vm1704, %v1697, %v1701
        %v1706 = vand.u32 2147483647, %v1639
        %vm1707 = vcmp.eq.f32.partialorder %v1706, 8.507059e+37
        %v1708 = vand.u32 %v1639, 2147483648
        %v1709 = vor.u32 1.1754944e-38, %v1708
        %v1710 = vsel %vm1707, %v1709, %v1705
        %v1711 = vmul.f32 %v1619, %v1710
        %v1712 = vrcp.pop %v1642
        %v1713 = vmul.f32 %v1642, %v1712
        %v1714 = vsub.f32 1.0, %v1713
        %v1715 = vmul.f32 %v1712, %v1714
        %v1716 = vadd.f32 %v1712, %v1715
        %vm1717 = vweird.f32 %v1642
        %vm1718 = vweird.f32 %v1712
        %vm1719 = vmor %vm1717, %vm1718
        %v1720 = vsel %vm1719, %v1712, %v1716
        %v1721 = vand.u32 2147483647, %v1642
        %vm1722 = vcmp.eq.f32.partialorder %v1721, 8.507059e+37
        %v1723 = vand.u32 %v1642, 2147483648
        %v1724 = vor.u32 1.1754944e-38, %v1723
        %v1725 = vsel %vm1722, %v1724, %v1720
        %v1726 = vmul.f32 %v1621, %v1725
        %v1727 = vrcp.pop %v1645
        %v1728 = vmul.f32 %v1645, %v1727
        %v1729 = vsub.f32 1.0, %v1728
        %v1730 = vmul.f32 %v1727, %v1729
        %v1731 = vadd.f32 %v1727, %v1730
        %vm1732 = vweird.f32 %v1645
        %vm1733 = vweird.f32 %v1727
        %vm1734 = vmor %vm1732, %vm1733
        %v1735 = vsel %vm1734, %v1727, %v1731
        %v1736 = vand.u32 2147483647, %v1645
        %vm1737 = vcmp.eq.f32.partialorder %v1736, 8.507059e+37
        %v1738 = vand.u32 %v1645, 2147483648
        %v1739 = vor.u32 1.1754944e-38, %v1738
        %v1740 = vsel %vm1737, %v1739, %v1735
        %v1741 = vmul.f32 %v1623, %v1740
        %v1742 = vrcp.pop %v1648
        %v1743 = vmul.f32 %v1648, %v1742
        %v1744 = vsub.f32 1.0, %v1743
        %v1745 = vmul.f32 %v1742, %v1744
        %v1746 = vadd.f32 %v1742, %v1745
        %vm1747 = vweird.f32 %v1648
        %vm1748 = vweird.f32 %v1742
        %vm1749 = vmor %vm1747, %vm1748
        %v1750 = vsel %vm1749, %v1742, %v1746
        %v1751 = vand.u32 2147483647, %v1648
        %vm1752 = vcmp.eq.f32.partialorder %v1751, 8.507059e+37
        %v1753 = vand.u32 %v1648, 2147483648
        %v1754 = vor.u32 1.1754944e-38, %v1753
        %v1755 = vsel %vm1752, %v1754, %v1750
        %v1756 = vmul.f32 %v1625, %v1755
        %v1757 = vrcp.pop %v1651
        %v1758 = vmul.f32 %v1651, %v1757
        %v1759 = vsub.f32 1.0, %v1758
        %v1760 = vmul.f32 %v1757, %v1759
        %v1761 = vadd.f32 %v1757, %v1760
        %vm1762 = vweird.f32 %v1651
        %vm1763 = vweird.f32 %v1757
        %vm1764 = vmor %vm1762, %vm1763
        %v1765 = vsel %vm1764, %v1757, %v1761
        %v1766 = vand.u32 2147483647, %v1651
        %vm1767 = vcmp.eq.f32.partialorder %v1766, 8.507059e+37
        %v1768 = vand.u32 %v1651, 2147483648
        %v1769 = vor.u32 1.1754944e-38, %v1768
        %v1770 = vsel %vm1767, %v1769, %v1765
        %v1771 = vmul.f32 %v1627, %v1770
        %v1772 = vpack.c.bf16 %v1666, %v1666
        %v1773 = vpack.c.bf16 %v1681, %v1681
        %v1774 = vpack.c.bf16 %v1696, %v1696
        %v1775 = vpack.c.bf16 %v1711, %v1711
        %v1776 = vpack.c.bf16 %v1726, %v1726
        %v1777 = vpack.c.bf16 %v1741, %v1741
        %v1778 = vpack.c.bf16 %v1756, %v1756
        %v1779 = vpack.c.bf16 %v1771, %v1771
        %v1781 = vsel %vm1579, %v1772, 0
        %vm1783 = vcmask 1043456
        %v1785 = vsel %vm1783, %v1410, 0
        %1787 = vmatpush.bf16.msra.mxu0 0
        %1788 = vmatpush.bf16.msra.mxu0 0
        %1789 = vmatpush.bf16.msra.mxu0 0
        %1790 = vmatpush.bf16.msra.mxu0 0
        %1791 = vmatpush.bf16.msra.mxu0 0
        %1792 = vmatpush.bf16.msra.mxu0 0
        %1793 = vmatpush.bf16.msra.mxu0 0
        %1794 = vmatpush.bf16.msra.mxu0 %v1785
        %1795 = vmatmul.bf16.gmra.mxu0 %v1781
        %v1796 = vpop.f32.mrf.mxu0
        %v1797 = vadd.f32 0.0, %v1796
        %v1798 = vpop.f32.mrf.mxu0
        %1799 = vdwg.mxu0
        %v1801 = vsel %vm1579, %v1773, 0
        %v1804 = vsel %vm1783, %v1411, 0
        %1806 = vmatpush.bf16.msra.mxu0 0
        %1807 = vmatpush.bf16.msra.mxu0 0
        %1808 = vmatpush.bf16.msra.mxu0 0
        %1809 = vmatpush.bf16.msra.mxu0 0
        %1810 = vmatpush.bf16.msra.mxu0 0
        %1811 = vmatpush.bf16.msra.mxu0 0
        %1812 = vmatpush.bf16.msra.mxu0 0
        %1813 = vmatpush.bf16.msra.mxu0 %v1804
        %1814 = vmatmul.bf16.gmra.mxu0 %v1801
        %v1815 = vpop.f32.mrf.mxu0
        %v1816 = vadd.f32 0.0, %v1815
        %v1817 = vpop.f32.mrf.mxu0
        %1818 = vdwg.mxu0
        %v1820 = vsel %vm1579, %v1774, 0
        %v1823 = vsel %vm1783, %v1412, 0
        %1825 = vmatpush.bf16.msra.mxu0 0
        %1826 = vmatpush.bf16.msra.mxu0 0
        %1827 = vmatpush.bf16.msra.mxu0 0
        %1828 = vmatpush.bf16.msra.mxu0 0
        %1829 = vmatpush.bf16.msra.mxu0 0
        %1830 = vmatpush.bf16.msra.mxu0 0
        %1831 = vmatpush.bf16.msra.mxu0 0
        %1832 = vmatpush.bf16.msra.mxu0 %v1823
        %1833 = vmatmul.bf16.gmra.mxu0 %v1820
        %v1834 = vpop.f32.mrf.mxu0
        %v1835 = vadd.f32 0.0, %v1834
        %v1836 = vpop.f32.mrf.mxu0
        %1837 = vdwg.mxu0
        %v1839 = vsel %vm1579, %v1775, 0
        %v1842 = vsel %vm1783, %v1413, 0
        %1844 = vmatpush.bf16.msra.mxu0 0
        %1845 = vmatpush.bf16.msra.mxu0 0
        %1846 = vmatpush.bf16.msra.mxu0 0
        %1847 = vmatpush.bf16.msra.mxu0 0
        %1848 = vmatpush.bf16.msra.mxu0 0
        %1849 = vmatpush.bf16.msra.mxu0 0
        %1850 = vmatpush.bf16.msra.mxu0 0
        %1851 = vmatpush.bf16.msra.mxu0 %v1842
        %1852 = vmatmul.bf16.gmra.mxu0 %v1839
        %v1853 = vpop.f32.mrf.mxu0
        %v1854 = vadd.f32 0.0, %v1853
        %v1855 = vpop.f32.mrf.mxu0
        %1856 = vdwg.mxu0
        %v1858 = vsel %vm1579, %v1776, 0
        %v1861 = vsel %vm1783, %v1414, 0
        %1863 = vmatpush.bf16.msra.mxu0 0
        %1864 = vmatpush.bf16.msra.mxu0 0
        %1865 = vmatpush.bf16.msra.mxu0 0
        %1866 = vmatpush.bf16.msra.mxu0 0
        %1867 = vmatpush.bf16.msra.mxu0 0
        %1868 = vmatpush.bf16.msra.mxu0 0
        %1869 = vmatpush.bf16.msra.mxu0 0
        %1870 = vmatpush.bf16.msra.mxu0 %v1861
        %1871 = vmatmul.bf16.gmra.mxu0 %v1858
        %v1872 = vpop.f32.mrf.mxu0
        %v1873 = vadd.f32 0.0, %v1872
        %v1874 = vpop.f32.mrf.mxu0
        %1875 = vdwg.mxu0
        %v1877 = vsel %vm1579, %v1777, 0
        %v1880 = vsel %vm1783, %v1415, 0
        %1882 = vmatpush.bf16.msra.mxu0 0
        %1883 = vmatpush.bf16.msra.mxu0 0
        %1884 = vmatpush.bf16.msra.mxu0 0
        %1885 = vmatpush.bf16.msra.mxu0 0
        %1886 = vmatpush.bf16.msra.mxu0 0
        %1887 = vmatpush.bf16.msra.mxu0 0
        %1888 = vmatpush.bf16.msra.mxu0 0
        %1889 = vmatpush.bf16.msra.mxu0 %v1880
        %1890 = vmatmul.bf16.gmra.mxu0 %v1877
        %v1891 = vpop.f32.mrf.mxu0
        %v1892 = vadd.f32 0.0, %v1891
        %v1893 = vpop.f32.mrf.mxu0
        %1894 = vdwg.mxu0
        %v1896 = vsel %vm1579, %v1778, 0
        %v1899 = vsel %vm1783, %v1416, 0
        %1901 = vmatpush.bf16.msra.mxu0 0
        %1902 = vmatpush.bf16.msra.mxu0 0
        %1903 = vmatpush.bf16.msra.mxu0 0
        %1904 = vmatpush.bf16.msra.mxu0 0
        %1905 = vmatpush.bf16.msra.mxu0 0
        %1906 = vmatpush.bf16.msra.mxu0 0
        %1907 = vmatpush.bf16.msra.mxu0 0
        %1908 = vmatpush.bf16.msra.mxu0 %v1899
        %1909 = vmatmul.bf16.gmra.mxu0 %v1896
        %v1910 = vpop.f32.mrf.mxu0
        %v1911 = vadd.f32 0.0, %v1910
        %v1912 = vpop.f32.mrf.mxu0
        %1913 = vdwg.mxu0
        %v1915 = vsel %vm1579, %v1779, 0
        %v1918 = vsel %vm1783, %v1417, 0
        %1920 = vmatpush.bf16.msra.mxu0 0
        %1921 = vmatpush.bf16.msra.mxu0 0
        %1922 = vmatpush.bf16.msra.mxu0 0
        %1923 = vmatpush.bf16.msra.mxu0 0
        %1924 = vmatpush.bf16.msra.mxu0 0
        %1925 = vmatpush.bf16.msra.mxu0 0
        %1926 = vmatpush.bf16.msra.mxu0 0
        %1927 = vmatpush.bf16.msra.mxu0 %v1918
        %1928 = vmatmul.bf16.gmra.mxu0 %v1915
        %v1929 = vpop.f32.mrf.mxu0
        %v1930 = vadd.f32 0.0, %v1929
        %v1931 = vpop.f32.mrf.mxu0
        %1932 = vdwg.mxu0
        %v1933 = vrot.slane %v1835, 4
        %v1934 = vsel %vm694, %v1933, %v1797
        %v1935 = vrot.slane %v1797, 4
        %v1936 = vsel %vm694, %v1835, %v1935
        %v1938 = vunpack.c.l.s4 1983009808
        %v1939 = vunpack.c.0.s8 %v1938
        %v1940 = vperm.slane %v1934, %v1939
        %v1942 = vunpack.c.l.s4 1983009808
        %v1943 = vunpack.c.0.s8 %v1942
        %v1944 = vperm.slane %v1936, %v1943
        %v1945 = vrot.slane %v1854, 4
        %v1946 = vsel %vm694, %v1945, %v1816
        %v1947 = vrot.slane %v1816, 4
        %v1948 = vsel %vm694, %v1854, %v1947
        %v1950 = vunpack.c.l.s4 1983009808
        %v1951 = vunpack.c.0.s8 %v1950
        %v1952 = vperm.slane %v1946, %v1951
        %v1954 = vunpack.c.l.s4 1983009808
        %v1955 = vunpack.c.0.s8 %v1954
        %v1956 = vperm.slane %v1948, %v1955
        %v1957 = vrot.slane %v1952, 4
        %v1958 = vsel %vm694, %v1957, %v1940
        %v1959 = vrot.slane %v1940, 4
        %v1960 = vsel %vm694, %v1952, %v1959
        %v1962 = vunpack.c.l.s4 1934713408
        %v1963 = vunpack.c.0.s8 %v1962
        %v1964 = vperm.slane %v1958, %v1963
        %v1966 = vunpack.c.l.s4 1934713408
        %v1967 = vunpack.c.0.s8 %v1966
        %v1968 = vperm.slane %v1960, %v1967
        %v1969 = vrot.slane %v1956, 4
        %v1970 = vsel %vm694, %v1969, %v1944
        %v1971 = vrot.slane %v1944, 4
        %v1972 = vsel %vm694, %v1956, %v1971
        %v1974 = vunpack.c.l.s4 1934713408
        %v1975 = vunpack.c.0.s8 %v1974
        %v1976 = vperm.slane %v1970, %v1975
        %v1978 = vunpack.c.l.s4 1934713408
        %v1979 = vunpack.c.0.s8 %v1978
        %v1980 = vperm.slane %v1972, %v1979
        %v1981 = vrot.slane %v1964, 4
        %v1982 = vsel %vm694, 0.0, %v1981
        %v1983 = vrot.slane %v1968, 4
        %v1984 = vsel %vm694, 0.0, %v1983
        %v1985 = vrot.slane %v1976, 4
        %v1986 = vsel %vm694, 0.0, %v1985
        %v1987 = vrot.slane %v1980, 4
        %v1988 = vsel %vm694, 0.0, %v1987
        %v1989 = vrot.slane %v1911, 4
        %v1990 = vsel %vm694, %v1989, %v1873
        %v1991 = vrot.slane %v1873, 4
        %v1992 = vsel %vm694, %v1911, %v1991
        %v1994 = vunpack.c.l.s4 1983009808
        %v1995 = vunpack.c.0.s8 %v1994
        %v1996 = vperm.slane %v1990, %v1995
        %v1998 = vunpack.c.l.s4 1983009808
        %v1999 = vunpack.c.0.s8 %v1998
        %v2000 = vperm.slane %v1992, %v1999
        %v2001 = vrot.slane %v1930, 4
        %v2002 = vsel %vm694, %v2001, %v1892
        %v2003 = vrot.slane %v1892, 4
        %v2004 = vsel %vm694, %v1930, %v2003
        %v2006 = vunpack.c.l.s4 1983009808
        %v2007 = vunpack.c.0.s8 %v2006
        %v2008 = vperm.slane %v2002, %v2007
        %v2010 = vunpack.c.l.s4 1983009808
        %v2011 = vunpack.c.0.s8 %v2010
        %v2012 = vperm.slane %v2004, %v2011
        %v2013 = vrot.slane %v2008, 4
        %v2014 = vsel %vm694, %v2013, %v1996
        %v2015 = vrot.slane %v1996, 4
        %v2016 = vsel %vm694, %v2008, %v2015
        %v2018 = vunpack.c.l.s4 1934713408
        %v2019 = vunpack.c.0.s8 %v2018
        %v2020 = vperm.slane %v2014, %v2019
        %v2022 = vunpack.c.l.s4 1934713408
        %v2023 = vunpack.c.0.s8 %v2022
        %v2024 = vperm.slane %v2016, %v2023
        %v2025 = vrot.slane %v2012, 4
        %v2026 = vsel %vm694, %v2025, %v2000
        %v2027 = vrot.slane %v2000, 4
        %v2028 = vsel %vm694, %v2012, %v2027
        %v2030 = vunpack.c.l.s4 1934713408
        %v2031 = vunpack.c.0.s8 %v2030
        %v2032 = vperm.slane %v2026, %v2031
        %v2034 = vunpack.c.l.s4 1934713408
        %v2035 = vunpack.c.0.s8 %v2034
        %v2036 = vperm.slane %v2028, %v2035
        %v2037 = vrot.slane %v2020, 4
        %v2038 = vsel %vm694, 0.0, %v2037
        %v2039 = vrot.slane %v2024, 4
        %v2040 = vsel %vm694, 0.0, %v2039
        %v2041 = vrot.slane %v2032, 4
        %v2042 = vsel %vm694, 0.0, %v2041
        %v2043 = vrot.slane %v2036, 4
        %v2044 = vsel %vm694, 0.0, %v2043
        %v2045 = vsel %vm694, %v1983, %v1964
        %v2047 = vunpack.c.l.s4 1983009808
        %v2048 = vunpack.c.0.s8 %v2047
        %v2049 = vperm.slane %v2045, %v2048
        %v2050 = vrot.slane %v1984, 4
        %v2051 = vsel %vm694, %v2050, %v1982
        %v2053 = vunpack.c.l.s4 1983009808
        %v2054 = vunpack.c.0.s8 %v2053
        %v2055 = vperm.slane %v2051, %v2054
        %v2056 = vsel %vm694, %v1987, %v1976
        %v2058 = vunpack.c.l.s4 1983009808
        %v2059 = vunpack.c.0.s8 %v2058
        %v2060 = vperm.slane %v2056, %v2059
        %v2061 = vrot.slane %v1988, 4
        %v2062 = vsel %vm694, %v2061, %v1986
        %v2064 = vunpack.c.l.s4 1983009808
        %v2065 = vunpack.c.0.s8 %v2064
        %v2066 = vperm.slane %v2062, %v2065
        %v2067 = vrot.slane %v2055, 4
        %v2068 = vsel %vm694, %v2067, %v2049
        %v2069 = vrot.slane %v2049, 4
        %v2070 = vsel %vm694, %v2055, %v2069
        %v2072 = vunpack.c.l.s4 1934713408
        %v2073 = vunpack.c.0.s8 %v2072
        %v2074 = vperm.slane %v2068, %v2073
        %v2076 = vunpack.c.l.s4 1934713408
        %v2077 = vunpack.c.0.s8 %v2076
        %v2078 = vperm.slane %v2070, %v2077
        %v2079 = vrot.slane %v2066, 4
        %v2080 = vsel %vm694, %v2079, %v2060
        %v2081 = vrot.slane %v2060, 4
        %v2082 = vsel %vm694, %v2066, %v2081
        %v2084 = vunpack.c.l.s4 1934713408
        %v2085 = vunpack.c.0.s8 %v2084
        %v2086 = vperm.slane %v2080, %v2085
        %v2088 = vunpack.c.l.s4 1934713408
        %v2089 = vunpack.c.0.s8 %v2088
        %v2090 = vperm.slane %v2082, %v2089
        %v2091 = vrot.slane %v2086, 4
        %v2092 = vsel %vm694, %v2091, %v2074
        %v2093 = vrot.slane %v2074, 4
        %v2094 = vsel %vm694, %v2086, %v2093
        %v2095 = vrot.slane %v2090, 4
        %v2096 = vsel %vm694, %v2095, %v2078
        %v2097 = vrot.slane %v2078, 4
        %v2098 = vsel %vm694, %v2090, %v2097
        %v2099 = vsel %vm694, %v2039, %v2020
        %v2101 = vunpack.c.l.s4 1983009808
        %v2102 = vunpack.c.0.s8 %v2101
        %v2103 = vperm.slane %v2099, %v2102
        %v2104 = vrot.slane %v2040, 4
        %v2105 = vsel %vm694, %v2104, %v2038
        %v2107 = vunpack.c.l.s4 1983009808
        %v2108 = vunpack.c.0.s8 %v2107
        %v2109 = vperm.slane %v2105, %v2108
        %v2110 = vsel %vm694, %v2043, %v2032
        %v2112 = vunpack.c.l.s4 1983009808
        %v2113 = vunpack.c.0.s8 %v2112
        %v2114 = vperm.slane %v2110, %v2113
        %v2115 = vrot.slane %v2044, 4
        %v2116 = vsel %vm694, %v2115, %v2042
        %v2118 = vunpack.c.l.s4 1983009808
        %v2119 = vunpack.c.0.s8 %v2118
        %v2120 = vperm.slane %v2116, %v2119
        %v2121 = vrot.slane %v2109, 4
        %v2122 = vsel %vm694, %v2121, %v2103
        %v2123 = vrot.slane %v2103, 4
        %v2124 = vsel %vm694, %v2109, %v2123
        %v2126 = vunpack.c.l.s4 1934713408
        %v2127 = vunpack.c.0.s8 %v2126
        %v2128 = vperm.slane %v2122, %v2127
        %v2130 = vunpack.c.l.s4 1934713408
        %v2131 = vunpack.c.0.s8 %v2130
        %v2132 = vperm.slane %v2124, %v2131
        %v2133 = vrot.slane %v2120, 4
        %v2134 = vsel %vm694, %v2133, %v2114
        %v2135 = vrot.slane %v2114, 4
        %v2136 = vsel %vm694, %v2120, %v2135
        %v2138 = vunpack.c.l.s4 1934713408
        %v2139 = vunpack.c.0.s8 %v2138
        %v2140 = vperm.slane %v2134, %v2139
        %v2142 = vunpack.c.l.s4 1934713408
        %v2143 = vunpack.c.0.s8 %v2142
        %v2144 = vperm.slane %v2136, %v2143
        %v2145 = vrot.slane %v2140, 4
        %v2146 = vsel %vm694, %v2145, %v2128
        %v2147 = vrot.slane %v2128, 4
        %v2148 = vsel %vm694, %v2140, %v2147
        %v2149 = vrot.slane %v2144, 4
        %v2150 = vsel %vm694, %v2149, %v2132
        %v2151 = vrot.slane %v2132, 4
        %v2152 = vsel %vm694, %v2144, %v2151
        %2155 = vrot.lane.b32.xlu0 %v2094, 32
        %v2156 = vpop.permute.xlu0 %2155
        %2157 = vrot.lane.b32.xlu0 %v2148, 32
        %v2158 = vpop.permute.xlu0 %2157
        %2163 = vrot.lane.b32.xlu0 %v2096, 64
        %v2164 = vpop.permute.xlu0 %2163
        %2165 = vrot.lane.b32.xlu0 %v2150, 64
        %v2166 = vpop.permute.xlu0 %2165
        %2171 = vrot.lane.b32.xlu0 %v2098, 96
        %v2172 = vpop.permute.xlu0 %2171
        %2173 = vrot.lane.b32.xlu0 %v2152, 96
        %v2174 = vpop.permute.xlu0 %2173
        %v2177 = vsel %vm1418, %v2092, %v2156
        %v2178 = vsel %vm1418, %v2146, %v2158
        %vm2179 = vcmask 523264
        %v2180 = vsel %vm2179, %v2177, %v2164
        %v2181 = vsel %vm2179, %v2178, %v2166
        %vm2182 = vcmask 785408
        %v2183 = vsel %vm2182, %v2180, %v2172
        %v2184 = vsel %vm2182, %v2181, %v2174
        %v2185 = vpack.c.bf16 %v2184, %v2183
        %v2186 = vld [vmem:[%s426] sm:$0xf]
        %v2187 = vld [vmem:[%s426 + $0x4] sm:$0xf]
        %v2188 = vld [vmem:[%s426 + $0x8] sm:$0xf]
        %v2189 = vld [vmem:[%s426 + $0xc] sm:$0xf]
        %v2190 = vld [vmem:[%s426 + $0x10] sm:$0xf]
        %v2191 = vld [vmem:[%s426 + $0x14] sm:$0xf]
        %v2192 = vld [vmem:[%s426 + $0x18] sm:$0xf]
        %v2193 = vld [vmem:[%s426 + $0x1c] sm:$0xf]
        %v2194 = vld [vmem:[%s426 + $0x20] sm:$0xf]
        %v2195 = vld [vmem:[%s426 + $0x24] sm:$0xf]
        %v2196 = vld [vmem:[%s426 + $0x28] sm:$0xf]
        %v2197 = vld [vmem:[%s426 + $0x2c] sm:$0xf]
        %v2198 = vld [vmem:[%s426 + $0x30] sm:$0xf]
        %v2199 = vld [vmem:[%s426 + $0x34] sm:$0xf]
        %v2200 = vld [vmem:[%s426 + $0x38] sm:$0xf]
        %v2201 = vld [vmem:[%s426 + $0x3c] sm:$0xf]
        %v2202 = vperm.slane %v460, 3
        %v2219 = vunpack.c.l.b16 %v2186
        %v2220 = vunpack.c.l.b16 %v2187
        %v2221 = vunpack.c.l.b16 %v2188
        %v2222 = vunpack.c.l.b16 %v2189
        %v2223 = vunpack.c.l.b16 %v2190
        %v2224 = vunpack.c.l.b16 %v2191
        %v2225 = vunpack.c.l.b16 %v2192
        %v2226 = vunpack.c.l.b16 %v2193
        %v2227 = vunpack.c.l.b16 %v2194
        %v2228 = vunpack.c.l.b16 %v2195
        %v2229 = vunpack.c.l.b16 %v2196
        %v2230 = vunpack.c.l.b16 %v2197
        %v2231 = vunpack.c.l.b16 %v2198
        %v2232 = vunpack.c.l.b16 %v2199
        %v2233 = vunpack.c.l.b16 %v2200
        %v2234 = vunpack.c.l.b16 %v2201
        %v2235 = vpack.c.b16 %v2220, %v2219
        %v2236 = vpack.c.b16 %v2222, %v2221
        %v2237 = vpack.c.b16 %v2224, %v2223
        %v2238 = vpack.c.b16 %v2226, %v2225
        %v2239 = vpack.c.b16 %v2228, %v2227
        %v2240 = vpack.c.b16 %v2230, %v2229
        %v2241 = vpack.c.b16 %v2232, %v2231
        %v2242 = vpack.c.b16 %v2234, %v2233
        %2251 = vmatpush.bf16.msra.mxu0 %v2242
        %2252 = vmatpush.bf16.msra.mxu0 %v2241
        %2253 = vmatpush.bf16.msra.mxu0 %v2240
        %2254 = vmatpush.bf16.msra.mxu0 %v2239
        %2255 = vmatpush.bf16.msra.mxu0 %v2238
        %2256 = vmatpush.bf16.msra.mxu0 %v2237
        %2257 = vmatpush.bf16.msra.mxu0 %v2236
        %2258 = vmatpush.bf16.msra.mxu0 %v2235
        %2259 = vmatmul.bf16.gmra.mxu0 %v2185
        %v2260 = vpop.f32.mrf.mxu0
        %v2261 = vadd.f32 %v2202, %v2260
        %v2262 = vpop.f32.mrf.mxu0
        %v2263 = vadd.f32 %v2202, %v2262
        %2264 = vdwg.mxu0
        %v2265 = vadd.f32 %v457, %v2261
        %v2266 = vadd.f32 %v458, %v2263
        %2267 = vadd.xlane.f32.xlu0 %v2265
        %v2268 = vpop.xlane.xlu0 %2267
        %2269 = vadd.xlane.f32.xlu0 %v2266
        %v2270 = vpop.xlane.xlu0 %2269
        %v2271 = vrcp.pop 128.0
        %v2272 = vmul.f32 128.0, %v2271
        %v2273 = vsub.f32 1.0, %v2272
        %v2274 = vmul.f32 %v2271, %v2273
        %v2275 = vadd.f32 %v2271, %v2274
        %vm2276 = vweird.f32 %v2271
        %v2277 = vsel %vm2276, %v2271, %v2275
        %v2278 = vmul.f32 %v2268, %v2277
        %v2279 = vmul.f32 %v2270, %v2277
        %v2280 = vsub.f32 %v2265, %v2278
        %v2281 = vsub.f32 %v2266, %v2279
        %v2282 = vmul.f32 %v2280, %v2280
        %v2283 = vmul.f32 %v2281, %v2281
        %2284 = vadd.xlane.f32.xlu0 %v2282
        %v2285 = vpop.xlane.xlu0 %2284
        %2286 = vadd.xlane.f32.xlu0 %v2283
        %v2287 = vpop.xlane.xlu0 %2286
        %v2288 = vmul.f32 %v2285, %v2277
        %v2289 = vmul.f32 %v2287, %v2277
        %v2290 = vadd.f32 %v2288, 1e-05
        %v2291 = vadd.f32 %v2289, 1e-05
        %v2292 = vrsqrt.pop %v2290
        %v2293 = vmul.f32 %v2292, %v2290
        %v2294 = vmul.f32 %v2293, %v2292
        %v2295 = vmul.f32 0.5, %v2294
        %v2296 = vsub.f32 1.5, %v2295
        %v2297 = vmul.f32 %v2292, %v2296
        %vm2298 = vweird.f32 %v2290
        %vm2299 = vweird.f32 %v2292
        %vm2300 = vmor %vm2298, %vm2299
        %v2301 = vsel %vm2300, %v2292, %v2297
        %v2302 = vrsqrt.pop %v2291
        %v2303 = vmul.f32 %v2302, %v2291
        %v2304 = vmul.f32 %v2303, %v2302
        %v2305 = vmul.f32 0.5, %v2304
        %v2306 = vsub.f32 1.5, %v2305
        %v2307 = vmul.f32 %v2302, %v2306
        %vm2308 = vweird.f32 %v2291
        %vm2309 = vweird.f32 %v2302
        %vm2310 = vmor %vm2308, %vm2309
        %v2311 = vsel %vm2310, %v2302, %v2307
        %v2312 = vmul.f32 %v2280, %v2301
        %v2313 = vmul.f32 %v2281, %v2311
        %v2314 = vperm.slane %v460, 5
        %v2315 = vmul.f32 %v2312, %v2314
        %v2316 = vmul.f32 %v2313, %v2314
        %v2317 = vperm.slane %v460, 6
        %v2318 = vadd.f32 %v2315, %v2317
        %v2319 = vadd.f32 %v2316, %v2317
        %v2320 = vpack.c.bf16 %v2319, %v2318
        %v2321 = vld [vmem:[%s431] sm:$0xff]
        %v2322 = vld [vmem:[%s431 + $0x8] sm:$0xff]
        %v2323 = vld [vmem:[%s431 + $0x10] sm:$0xff]
        %v2324 = vld [vmem:[%s431 + $0x18] sm:$0xff]
        %v2325 = vld [vmem:[%s431 + $0x20] sm:$0xff]
        %v2326 = vld [vmem:[%s431 + $0x28] sm:$0xff]
        %v2327 = vld [vmem:[%s431 + $0x30] sm:$0xff]
        %v2328 = vld [vmem:[%s431 + $0x38] sm:$0xff]
        %v2329 = vld [vmem:[%s431 + $0x40] sm:$0xff]
        %v2330 = vld [vmem:[%s431 + $0x48] sm:$0xff]
        %v2331 = vld [vmem:[%s431 + $0x50] sm:$0xff]
        %v2332 = vld [vmem:[%s431 + $0x58] sm:$0xff]
        %v2333 = vld [vmem:[%s431 + $0x60] sm:$0xff]
        %v2334 = vld [vmem:[%s431 + $0x68] sm:$0xff]
        %v2335 = vld [vmem:[%s431 + $0x70] sm:$0xff]
        %v2336 = vld [vmem:[%s431 + $0x78] sm:$0xff]
        %v2337 = vld [vmem:[%s445] sm:$0x3]
        %v2339 = vperm.slane %v2337, 0
        %v2340 = vperm.slane %v2337, 1
        %v2359 = vunpack.c.l.b16 %v2321
        %v2360 = vunpack.c.h.b16 %v2321
        %v2361 = vunpack.c.l.b16 %v2322
        %v2362 = vunpack.c.h.b16 %v2322
        %v2363 = vunpack.c.l.b16 %v2323
        %v2364 = vunpack.c.h.b16 %v2323
        %v2365 = vunpack.c.l.b16 %v2324
        %v2366 = vunpack.c.h.b16 %v2324
        %v2367 = vunpack.c.l.b16 %v2325
        %v2368 = vunpack.c.h.b16 %v2325
        %v2369 = vunpack.c.l.b16 %v2326
        %v2370 = vunpack.c.h.b16 %v2326
        %v2371 = vunpack.c.l.b16 %v2327
        %v2372 = vunpack.c.h.b16 %v2327
        %v2373 = vunpack.c.l.b16 %v2328
        %v2374 = vunpack.c.h.b16 %v2328
        %v2375 = vunpack.c.l.b16 %v2329
        %v2376 = vunpack.c.h.b16 %v2329
        %v2377 = vunpack.c.l.b16 %v2330
        %v2378 = vunpack.c.h.b16 %v2330
        %v2379 = vunpack.c.l.b16 %v2331
        %v2380 = vunpack.c.h.b16 %v2331
        %v2381 = vunpack.c.l.b16 %v2332
        %v2382 = vunpack.c.h.b16 %v2332
        %v2383 = vunpack.c.l.b16 %v2333
        %v2384 = vunpack.c.h.b16 %v2333
        %v2385 = vunpack.c.l.b16 %v2334
        %v2386 = vunpack.c.h.b16 %v2334
        %v2387 = vunpack.c.l.b16 %v2335
        %v2388 = vunpack.c.h.b16 %v2335
        %v2389 = vunpack.c.l.b16 %v2336
        %v2390 = vunpack.c.h.b16 %v2336
        %v2391 = vpack.c.b16 %v2361, %v2359
        %v2392 = vpack.c.b16 %v2362, %v2360
        %v2393 = vpack.c.b16 %v2365, %v2363
        %v2394 = vpack.c.b16 %v2366, %v2364
        %v2395 = vpack.c.b16 %v2369, %v2367
        %v2396 = vpack.c.b16 %v2370, %v2368
        %v2397 = vpack.c.b16 %v2373, %v2371
        %v2398 = vpack.c.b16 %v2374, %v2372
        %v2399 = vpack.c.b16 %v2377, %v2375
        %v2400 = vpack.c.b16 %v2378, %v2376
        %v2401 = vpack.c.b16 %v2381, %v2379
        %v2402 = vpack.c.b16 %v2382, %v2380
        %v2403 = vpack.c.b16 %v2385, %v2383
        %v2404 = vpack.c.b16 %v2386, %v2384
        %v2405 = vpack.c.b16 %v2389, %v2387
        %v2406 = vpack.c.b16 %v2390, %v2388
        %2423 = vmatpush.bf16.msra.mxu0 %v2405
        %2424 = vmatpush.bf16.msra.mxu0 %v2403
        %2425 = vmatpush.bf16.msra.mxu0 %v2401
        %2426 = vmatpush.bf16.msra.mxu0 %v2399
        %2427 = vmatpush.bf16.msra.mxu0 %v2397
        %2428 = vmatpush.bf16.msra.mxu0 %v2395
        %2429 = vmatpush.bf16.msra.mxu0 %v2393
        %2430 = vmatpush.bf16.msra.mxu0 %v2391
        %2431 = vmatmul.bf16.gmra.mxu0 %v2320
        %v2432 = vpop.f32.mrf.mxu0
        %v2433 = vadd.f32 %v2339, %v2432
        %v2434 = vpop.f32.mrf.mxu0
        %v2435 = vadd.f32 %v2339, %v2434
        %2436 = vdwg.mxu0
        %2437 = vmatpush.bf16.msra.mxu0 %v2406
        %2438 = vmatpush.bf16.msra.mxu0 %v2404
        %2439 = vmatpush.bf16.msra.mxu0 %v2402
        %2440 = vmatpush.bf16.msra.mxu0 %v2400
        %2441 = vmatpush.bf16.msra.mxu0 %v2398
        %2442 = vmatpush.bf16.msra.mxu0 %v2396
        %2443 = vmatpush.bf16.msra.mxu0 %v2394
        %2444 = vmatpush.bf16.msra.mxu0 %v2392
        %2445 = vmatmul.bf16.gmra.mxu0 %v2320
        %v2446 = vpop.f32.mrf.mxu0
        %v2447 = vadd.f32 %v2340, %v2446
        %v2448 = vpop.f32.mrf.mxu0
        %v2449 = vadd.f32 %v2340, %v2448
        %2450 = vdwg.mxu0
        %v2451 = vmax.f32 %v2433, 0.0
        %v2452 = vmax.f32 %v2447, 0.0
        %v2453 = vmax.f32 %v2435, 0.0
        %v2454 = vmax.f32 %v2449, 0.0
        %v2455 = vpack.c.bf16 %v2453, %v2451
        %v2456 = vpack.c.bf16 %v2454, %v2452
        %v2457 = vld [vmem:[%s436] sm:$0xf]
        %v2458 = vld [vmem:[%s436 + $0x4] sm:$0xf]
        %v2459 = vld [vmem:[%s436 + $0x8] sm:$0xf]
        %v2460 = vld [vmem:[%s436 + $0xc] sm:$0xf]
        %v2461 = vld [vmem:[%s436 + $0x10] sm:$0xf]
        %v2462 = vld [vmem:[%s436 + $0x14] sm:$0xf]
        %v2463 = vld [vmem:[%s436 + $0x18] sm:$0xf]
        %v2464 = vld [vmem:[%s436 + $0x1c] sm:$0xf]
        %v2465 = vld [vmem:[%s436 + $0x20] sm:$0xf]
        %v2466 = vld [vmem:[%s436 + $0x24] sm:$0xf]
        %v2467 = vld [vmem:[%s436 + $0x28] sm:$0xf]
        %v2468 = vld [vmem:[%s436 + $0x2c] sm:$0xf]
        %v2469 = vld [vmem:[%s436 + $0x30] sm:$0xf]
        %v2470 = vld [vmem:[%s436 + $0x34] sm:$0xf]
        %v2471 = vld [vmem:[%s436 + $0x38] sm:$0xf]
        %v2472 = vld [vmem:[%s436 + $0x3c] sm:$0xf]
        %v2473 = vld [vmem:[%s436 + $0x40] sm:$0xf]
        %v2474 = vld [vmem:[%s436 + $0x44] sm:$0xf]
        %v2475 = vld [vmem:[%s436 + $0x48] sm:$0xf]
        %v2476 = vld [vmem:[%s436 + $0x4c] sm:$0xf]
        %v2477 = vld [vmem:[%s436 + $0x50] sm:$0xf]
        %v2478 = vld [vmem:[%s436 + $0x54] sm:$0xf]
        %v2479 = vld [vmem:[%s436 + $0x58] sm:$0xf]
        %v2480 = vld [vmem:[%s436 + $0x5c] sm:$0xf]
        %v2481 = vld [vmem:[%s436 + $0x60] sm:$0xf]
        %v2482 = vld [vmem:[%s436 + $0x64] sm:$0xf]
        %v2483 = vld [vmem:[%s436 + $0x68] sm:$0xf]
        %v2484 = vld [vmem:[%s436 + $0x6c] sm:$0xf]
        %v2485 = vld [vmem:[%s436 + $0x70] sm:$0xf]
        %v2486 = vld [vmem:[%s436 + $0x74] sm:$0xf]
        %v2487 = vld [vmem:[%s436 + $0x78] sm:$0xf]
        %v2488 = vld [vmem:[%s436 + $0x7c] sm:$0xf]
        %v2489 = vperm.slane %v460, 4
        %v2522 = vunpack.c.l.b16 %v2457
        %v2523 = vunpack.c.l.b16 %v2458
        %v2524 = vunpack.c.l.b16 %v2459
        %v2525 = vunpack.c.l.b16 %v2460
        %v2526 = vunpack.c.l.b16 %v2461
        %v2527 = vunpack.c.l.b16 %v2462
        %v2528 = vunpack.c.l.b16 %v2463
        %v2529 = vunpack.c.l.b16 %v2464
        %v2530 = vunpack.c.l.b16 %v2465
        %v2531 = vunpack.c.l.b16 %v2466
        %v2532 = vunpack.c.l.b16 %v2467
        %v2533 = vunpack.c.l.b16 %v2468
        %v2534 = vunpack.c.l.b16 %v2469
        %v2535 = vunpack.c.l.b16 %v2470
        %v2536 = vunpack.c.l.b16 %v2471
        %v2537 = vunpack.c.l.b16 %v2472
        %v2538 = vunpack.c.l.b16 %v2473
        %v2539 = vunpack.c.l.b16 %v2474
        %v2540 = vunpack.c.l.b16 %v2475
        %v2541 = vunpack.c.l.b16 %v2476
        %v2542 = vunpack.c.l.b16 %v2477
        %v2543 = vunpack.c.l.b16 %v2478
        %v2544 = vunpack.c.l.b16 %v2479
        %v2545 = vunpack.c.l.b16 %v2480
        %v2546 = vunpack.c.l.b16 %v2481
        %v2547 = vunpack.c.l.b16 %v2482
        %v2548 = vunpack.c.l.b16 %v2483
        %v2549 = vunpack.c.l.b16 %v2484
        %v2550 = vunpack.c.l.b16 %v2485
        %v2551 = vunpack.c.l.b16 %v2486
        %v2552 = vunpack.c.l.b16 %v2487
        %v2553 = vunpack.c.l.b16 %v2488
        %v2554 = vpack.c.b16 %v2523, %v2522
        %v2555 = vpack.c.b16 %v2525, %v2524
        %v2556 = vpack.c.b16 %v2527, %v2526
        %v2557 = vpack.c.b16 %v2529, %v2528
        %v2558 = vpack.c.b16 %v2531, %v2530
        %v2559 = vpack.c.b16 %v2533, %v2532
        %v2560 = vpack.c.b16 %v2535, %v2534
        %v2561 = vpack.c.b16 %v2537, %v2536
        %v2562 = vpack.c.b16 %v2539, %v2538
        %v2563 = vpack.c.b16 %v2541, %v2540
        %v2564 = vpack.c.b16 %v2543, %v2542
        %v2565 = vpack.c.b16 %v2545, %v2544
        %v2566 = vpack.c.b16 %v2547, %v2546
        %v2567 = vpack.c.b16 %v2549, %v2548
        %v2568 = vpack.c.b16 %v2551, %v2550
        %v2569 = vpack.c.b16 %v2553, %v2552
        %2586 = vmatpush.bf16.msra.mxu0 %v2561
        %2587 = vmatpush.bf16.msra.mxu0 %v2560
        %2588 = vmatpush.bf16.msra.mxu0 %v2559
        %2589 = vmatpush.bf16.msra.mxu0 %v2558
        %2590 = vmatpush.bf16.msra.mxu0 %v2557
        %2591 = vmatpush.bf16.msra.mxu0 %v2556
        %2592 = vmatpush.bf16.msra.mxu0 %v2555
        %2593 = vmatpush.bf16.msra.mxu0 %v2554
        %2594 = vmatmul.bf16.gmra.mxu0 %v2455
        %v2595 = vpop.f32.mrf.mxu0
        %v2596 = vadd.f32 %v2489, %v2595
        %v2597 = vpop.f32.mrf.mxu0
        %v2598 = vadd.f32 %v2489, %v2597
        %2599 = vdwg.mxu0
        %2600 = vmatpush.bf16.msra.mxu0 %v2569
        %2601 = vmatpush.bf16.msra.mxu0 %v2568
        %2602 = vmatpush.bf16.msra.mxu0 %v2567
        %2603 = vmatpush.bf16.msra.mxu0 %v2566
        %2604 = vmatpush.bf16.msra.mxu0 %v2565
        %2605 = vmatpush.bf16.msra.mxu0 %v2564
        %2606 = vmatpush.bf16.msra.mxu0 %v2563
        %2607 = vmatpush.bf16.msra.mxu0 %v2562
        %2608 = vmatmul.bf16.gmra.mxu0 %v2456
        %v2609 = vpop.f32.mrf.mxu0
        %v2610 = vadd.f32 %v2596, %v2609
        %v2611 = vpop.f32.mrf.mxu0
        %v2612 = vadd.f32 %v2598, %v2611
        %2613 = vdwg.mxu0
        %v2614 = vadd.f32 %v2318, %v2610
        %v2615 = vadd.f32 %v2319, %v2612
        %2616 = vadd.xlane.f32.xlu0 %v2614
        %v2617 = vpop.xlane.xlu0 %2616
        %2618 = vadd.xlane.f32.xlu0 %v2615
        %v2619 = vpop.xlane.xlu0 %2618
        %v2620 = vmul.f32 %v2617, %v2277
        %v2621 = vmul.f32 %v2619, %v2277
        %v2622 = vsub.f32 %v2614, %v2620
        %v2623 = vsub.f32 %v2615, %v2621
        %v2624 = vmul.f32 %v2622, %v2622
        %v2625 = vmul.f32 %v2623, %v2623
        %2626 = vadd.xlane.f32.xlu0 %v2624
        %v2627 = vpop.xlane.xlu0 %2626
        %2628 = vadd.xlane.f32.xlu0 %v2625
        %v2629 = vpop.xlane.xlu0 %2628
        %v2630 = vmul.f32 %v2627, %v2277
        %v2631 = vmul.f32 %v2629, %v2277
        %v2632 = vadd.f32 %v2630, 1e-05
        %v2633 = vadd.f32 %v2631, 1e-05
        %v2634 = vrsqrt.pop %v2632
        %v2635 = vmul.f32 %v2634, %v2632
        %v2636 = vmul.f32 %v2635, %v2634
        %v2637 = vmul.f32 0.5, %v2636
        %v2638 = vsub.f32 1.5, %v2637
        %v2639 = vmul.f32 %v2634, %v2638
        %vm2640 = vweird.f32 %v2632
        %vm2641 = vweird.f32 %v2634
        %vm2642 = vmor %vm2640, %vm2641
        %v2643 = vsel %vm2642, %v2634, %v2639
        %v2644 = vrsqrt.pop %v2633
        %v2645 = vmul.f32 %v2644, %v2633
        %v2646 = vmul.f32 %v2645, %v2644
        %v2647 = vmul.f32 0.5, %v2646
        %v2648 = vsub.f32 1.5, %v2647
        %v2649 = vmul.f32 %v2644, %v2648
        %vm2650 = vweird.f32 %v2633
        %vm2651 = vweird.f32 %v2644
        %vm2652 = vmor %vm2650, %vm2651
        %v2653 = vsel %vm2652, %v2644, %v2649
        %v2654 = vmul.f32 %v2622, %v2643
        %v2655 = vmul.f32 %v2623, %v2653
        %v2656 = vperm.slane %v460, 7
        %v2657 = vmul.f32 %v2654, %v2656
        %v2658 = vmul.f32 %v2655, %v2656
        %v2659 = vperm.slane %v461, 0
        %v2660 = vadd.f32 %v2657, %v2659
        %v2661 = vadd.f32 %v2658, %v2659
        %2662 = vst [vmem:[#allocation2] sm:$0xff] %v2660
        %2663 = vst [vmem:[#allocation2 + $0x8] sm:$0xff] %v2661
        %p2664 = scmp.eq.s32.totalorder %s31, 1
        // Predicated region
        $region53: #{transformer_encoder_net.1} parent=47 // pred_check
          %p2665 = pneg %p2664
        $region54: #{transformer_encoder_net.1} parent=47 // pred_check_branch
          %2667 = sbr.rel (%p2665) target = $region56
        $region55: #{transformer_encoder_net.1} parent=47 // pred_region
          %2668 = vst [vmem:[%s403] sm:$0xff] %v2660
          %2669 = vst [vmem:[%s403 + $0x8] sm:$0xff] %v2661
          %v2670 = vsel %vm1579, %v1666, 0.0
          %v2671 = vsel %vm1579, %v1681, 0.0
          %v2672 = vadd.f32 %v2670, %v2671
          %v2673 = vsel %vm1579, %v1696, 0.0
          %v2674 = vadd.f32 %v2672, %v2673
          %v2675 = vsel %vm1579, %v1711, 0.0
          %v2676 = vadd.f32 %v2674, %v2675
          %v2677 = vsel %vm1579, %v1726, 0.0
          %v2678 = vsel %vm1579, %v1741, 0.0
          %v2679 = vadd.f32 %v2677, %v2678
          %v2680 = vsel %vm1579, %v1756, 0.0
          %v2681 = vadd.f32 %v2679, %v2680
          %v2682 = vsel %vm1579, %v1771, 0.0
          %v2683 = vadd.f32 %v2681, %v2682
          %v2684 = vrcp.pop 4.0
          %v2685 = vmul.f32 4.0, %v2684
          %v2686 = vsub.f32 1.0, %v2685
          %v2687 = vmul.f32 %v2684, %v2686
          %v2688 = vadd.f32 %v2684, %v2687
          %vm2689 = vweird.f32 %v2684
          %v2690 = vsel %vm2689, %v2684, %v2688
          %v2691 = vmul.f32 %v2676, %v2690
          %v2692 = vmul.f32 %v2683, %v2690
          %2693 = vst.msk [vmem:[%s410] sm:$0xff] %vm1579, %v2691
          %2694 = vst.msk [vmem:[%s410 + $0x8] sm:$0xff] %vm1579, %v2692
        $region56: #{transformer_encoder_net.1} parent=47 // pred_fallthru
          _
        %s2695 = sand.u32 %s228, 1
        %s2696 = scalar_lea.sflag [#allocation4], %s2695
        %s2697 = sand.u32 %s228, 1
        %s2698 = smul.addr %s2697, 16
        %s2699 = scalar_lea.vmem [#allocation3], %s2698
        %s2700 = sand.u32 %s254, 1
        %s2701 = scalar_lea.sflag [#allocation6], %s2700
        %s2702 = sand.u32 %s254, 1
        %s2703 = smul.addr %s2702, 16
        %s2704 = scalar_lea.vmem [#allocation5], %s2703
        // Predicated region
        $region57: #{transformer_encoder_net.1} parent=47 // pred_check
          %p2705 = pneg %p238
        $region58: #{transformer_encoder_net.1} parent=47 // pred_check_branch
          %2707 = sbr.rel (%p2705) target = $region60
        $region59: #{transformer_encoder_net.1} parent=47 // pred_region
          %s2708 = smul.u32 2, %s30
          %2710 = vsyncadd %s2696, 0
          %s2711 = smul.addr %s2708, 8
          %s2712 = scalar_lea.hbm %s7, %s2711
          %s2713 = sshll.u32 %s2699, 4
          %s2714 = int_to_ptr.vmem [resolvable:$true] %s2713
          %s2715 = sshll.u32 %s2712, 4
          %s2716 = int_to_ptr.hbm [resolvable:$true] %s2715
          %2721 = dma.vmem_to_hbm [thread:$0]  %s2714, 256, %s2716, %s2696, 128, 128, 8
        $region60: #{transformer_encoder_net.1} parent=47 // pred_fallthru
          _
        // Predicated region
        $region61: #{transformer_encoder_net.1} parent=47 // pred_check
          %p2722 = pneg %p264
        $region62: #{transformer_encoder_net.1} parent=47 // pred_check_branch
          %2724 = sbr.rel (%p2722) target = $region64
        $region63: #{transformer_encoder_net.1} parent=47 // pred_region
          %s2725 = smul.u32 2, %s30
          %2727 = vsyncadd %s2701, 0
          %s2728 = smul.addr %s2725, 8
          %s2729 = scalar_lea.hbm %s8, %s2728
          %s2730 = sshll.u32 %s2704, 4
          %s2731 = int_to_ptr.vmem [resolvable:$true] %s2730
          %s2732 = sshll.u32 %s2729, 4
          %s2733 = int_to_ptr.hbm [resolvable:$true] %s2732
          %2738 = dma.vmem_to_hbm [thread:$0]  %s2731, 256, %s2733, %s2701, 128, 128, 8
        $region64: #{transformer_encoder_net.1} parent=47 // pred_fallthru
          _
      $region48: #{transformer_encoder_net.1} parent=5 // pred_fallthru
        _
      %p2739 = scmp.le.s32.totalorder 2, %s21
      // Predicated region
      $region65: #{transformer_encoder_net.1} parent=5 // pred_check
        %p2740 = pneg %p2739
      $region66: #{transformer_encoder_net.1} parent=5 // pred_check_branch
        %2742 = sbr.rel (%p2740) target = $region68
      $region67: #{transformer_encoder_net.1} parent=5 // pred_region
        %s2743 = ssub.s32 %s21, 2
        // Predicated region
        $region69: #{transformer_encoder_net.1} parent=67 // pred_check
          %p2744 = pneg %p244
        $region70: #{transformer_encoder_net.1} parent=67 // pred_check_branch
          %2746 = sbr.rel (%p2744) target = $region72
        $region71: #{transformer_encoder_net.1} parent=67 // pred_region
          %s2747 = sand.u32 %s229, 1
          %s2748 = scalar_lea.sflag [#allocation4], %s2747
          %s2749 = sand.u32 %s229, 1
          %s2750 = smul.addr %s2749, 16
          %s2751 = scalar_lea.vmem [#allocation3], %s2750
          %2753 = dma.done %s2748, 256
        $region72: #{transformer_encoder_net.1} parent=67 // pred_fallthru
          _
        // Predicated region
        $region73: #{transformer_encoder_net.1} parent=67 // pred_check
          %p2754 = pneg %p270
        $region74: #{transformer_encoder_net.1} parent=67 // pred_check_branch
          %2756 = sbr.rel (%p2754) target = $region76
        $region75: #{transformer_encoder_net.1} parent=67 // pred_region
          %s2757 = sand.u32 %s255, 1
          %s2758 = scalar_lea.sflag [#allocation6], %s2757
          %s2759 = sand.u32 %s255, 1
          %s2760 = smul.addr %s2759, 16
          %s2761 = scalar_lea.vmem [#allocation5], %s2760
          %2763 = dma.done %s2758, 256
        $region76: #{transformer_encoder_net.1} parent=67 // pred_fallthru
          _
      $region68: #{transformer_encoder_net.1} parent=5 // pred_fallthru
        _
    $region6: #{transformer_encoder_net.1} parent=1 // loop_footer
      %s25 = sadd.s32 1, %s21
    $region7: #{transformer_encoder_net.1} parent=1 // loop_footer_branch
      %20 = sbr.rel target = $region3
    $region8: #{transformer_encoder_net.1} parent=1 // loop_exit
      _
    %2764 = vsyncpa [#allocation4], 1
    %s2765 = scalar_lea.sflag [#allocation4], 1
    %2766 = vsyncpa %s2765, 1
    %2767 = vsyncpa [#allocation6], 1
    %s2768 = scalar_lea.sflag [#allocation6], 1
    %2769 = vsyncpa %s2768, 1

</llo_original>
